<compile_context>
chip_gen: v5e
topology: v5e:2x2
jax: 0.10.0
libtpu: 0.0.40
codegen_flags: <defaults>
</compile_context>

<pallas_src>
import functools
import numpy as np
import jax
import jax.numpy as jnp
from jax import lax
from jax.experimental import pallas as pl
from jax.experimental.pallas import tpu as pltpu

_HCHUNK = 256   # gen_im rows per grid step: contiguous 1 MiB (f32) / 0.5 MiB (bf16)


# --------------------------- bicubic downsample -----------------------------

def _bicubic_kernel_1d(x, a=-0.50):
    x = abs(x)
    if x <= 1.0:
        return (a + 2.0) * x ** 3 - (a + 3.0) * x ** 2 + 1.0
    elif x < 2.0:
        return a * x ** 3 - 5.0 * a * x ** 2 + 8.0 * a * x - 4.0 * a
    return 0.0


def _build_downsample_matrix(in_size, factor):
    """Dense (out, in_size) matrix of the strided bicubic depthwise conv with
    the reflect padding folded directly into the filter bank."""
    size = factor * 4
    k = np.array(
        [_bicubic_kernel_1d((i - np.floor(size / 2) + 0.5) / factor) for i in range(size)],
        dtype=np.float64)
    k = k / k.sum()
    stride = factor
    pad_along = size - stride                  # filter - stride (reflect pad amount)
    pad_lo = pad_along // 2
    padded = in_size + pad_along
    out = (padded - size) // stride + 1
    d_pad = np.zeros((out, padded), np.float64)
    for o in range(out):
        d_pad[o, o * stride:o * stride + size] = k
    # Fold reflect padding (edge pixel excluded, matching torch/np 'reflect').
    d = np.zeros((out, in_size), np.float64)
    for p in range(padded):
        src = p - pad_lo
        if src < 0:
            src = -src
        elif src >= in_size:
            src = 2 * (in_size - 1) - src
        d[:, src] += d_pad[:, p]
    return jnp.asarray(d.astype(np.float32)), out


# ------------------------------ in-kernel atan2 ------------------------------

def _atan2_nonneg(a, b):
    """atan2(a, b) for a >= 0, b > 0  ==  atan(a / b) in [0, pi/2).
    Cephes-style atanf (range reduction + odd poly); divides go to the EUP
    via approx reciprocal, keeping the VALU slot free."""
    t = a * pl.reciprocal(b, approx=True)
    big = t > 2.414213562373095            # tan(3*pi/8)
    mid = t > 0.4142135623730951           # tan(pi/8)
    x = jnp.where(big, -pl.reciprocal(t, approx=True),
                  jnp.where(mid, (t - 1.0) * pl.reciprocal(t + 1.0, approx=True), t))
    y0 = jnp.where(big, np.float32(np.pi / 2),
                   jnp.where(mid, np.float32(np.pi / 4), np.float32(0.0)))
    z = x * x
    p = (((8.05374449538e-2 * z - 1.38776856032e-1) * z
          + 1.99777106478e-1) * z - 3.33329491539e-1) * z * x + x
    return y0 + p


# ------------------ fused downsample + L2/L1 (+ GEOCROSS) --------------------

def _fused_loss_kernel(with_geo, d_ref, dcol_ref, x_ref, r_ref, *rest):
    if with_geo:
        lat_ref, l2_ref, l1_ref, geo_ref, acc_ref = rest
    else:
        l2_ref, l1_ref, acc_ref = rest
        lat_ref = geo_ref = None

    c = pl.program_id(1)
    w = pl.program_id(2)
    last = pl.num_programs(2) - 1

    # Per-(b,c) accumulator over the chunk ("arbitrary") axis only; (b,c) are
    # parallel, each grid column owns its own output blocks.
    @pl.when(w == 0)
    def _():
        acc_ref[...] = jnp.zeros_like(acc_ref)

    # ---- per-chunk downsample partial: all MXU operands in bf16 -------------
    x = x_ref[0, 0].astype(jnp.bfloat16)            # [HCHUNK, 1024] image rows
    d = d_ref[...]                                   # [hout,   1024] bf16
    # T = X_chunk @ D^T : stream the image as LHS (M=HCHUNK, K=1024, N=hout)
    t = lax.dot_general(x, d, (((1,), (1,)), ((), ())),
                        preferred_element_type=jnp.float32)       # [HCHUNK, hout]
    # low += D[:, chunk] @ T  (partial of D @ X @ D^T, summed over chunks)
    acc_ref[...] += lax.dot_general(dcol_ref[...], t.astype(jnp.bfloat16),
                                    (((1,), (0,)), ((), ())),
                                    preferred_element_type=jnp.float32)

    # ---- epilogue on the LAST chunk of each (b, c): pixel-loss partials -----
    @pl.when(w == last)
    def _():
        diff = acc_ref[...] - r_ref[0, 0]
        l2_ref[0, 0] = jnp.broadcast_to(
            jnp.sum(diff * diff, axis=(0, 1), keepdims=True), (8, 128))
        l1_ref[0, 0] = jnp.broadcast_to(
            jnp.sum(jnp.abs(diff), axis=(0, 1), keepdims=True), (8, 128))

    # ---- GEOCROSS, fused: once per batch (channel 0, last chunk) ------------
    if with_geo:
        @pl.when(jnp.logical_and(w == last, c == 0))
        def _():
            lat = lat_ref[0]                                        # [S, 512] f32
            s = lat.shape[0]
            g = lax.dot_general(lat, lat, (((1,), (1,)), ((), ())),
                                preferred_element_type=jnp.float32)  # Gram [S, S]
            row = lax.broadcasted_iota(jnp.int32, (s, s), 0)
            col = lax.broadcasted_iota(jnp.int32, (s, s), 1)
            gd = jnp.where(row == col, g, 0.0)                       # diag only
            n_i = jnp.sum(gd, axis=1, keepdims=True)                 # [S,1] ||x_i||^2
            n_j = jnp.sum(gd, axis=0, keepdims=True)                 # [1,S] ||x_j||^2
            sq_diff = jnp.maximum(n_i + n_j - 2.0 * g, 0.0)          # ||x_i - x_j||^2
            sq_sum = jnp.maximum(n_i + n_j + 2.0 * g, 0.0)           # ||x_i + x_j||^2
            av = jnp.sqrt(sq_diff + 1e-9)
            bv = jnp.sqrt(sq_sum + 1e-9)
            dv = 2.0 * _atan2_nonneg(av, bv)
            geo = jnp.sum(dv * dv, axis=(0, 1), keepdims=True) * (512.0 / (s * s * 8.0))
            geo_ref[0, 0] = jnp.broadcast_to(geo, (8, 128))


def fused_losses(gen_im, ref_im, d_mat_bf16, eps, latent=None, hchunk=_HCHUNK):
    """Returns (l2, l1, geocross) scalars. geocross == 0.0 when latent is None."""
    b, c, h, w = gen_im.shape
    hout = ref_im.shape[2]
    assert d_mat_bf16.shape == (hout, h) and h == w and h % hchunk == 0
    nch = h // hchunk
    with_geo = latent is not None
    kernel = functools.partial(_fused_loss_kernel, with_geo)

    in_specs = [
        pl.BlockSpec((hout, h), lambda i, j, k: (0, 0)),              # D (full)
        pl.BlockSpec((hout, hchunk), lambda i, j, k: (0, k)),         # D column chunk
        pl.BlockSpec((1, 1, hchunk, w), lambda i, j, k: (i, j, k, 0)),  # gen_im rows
        pl.BlockSpec((1, 1, hout, hout), lambda i, j, k: (i, j, 0, 0)),  # ref_im
    ]
    args = [d_mat_bf16, d_mat_bf16, gen_im, ref_im]
    out_specs = [
        pl.BlockSpec((1, 1, 8, 128), lambda i, j, k: (i, j, 0, 0)),   # L2 partials
        pl.BlockSpec((1, 1, 8, 128), lambda i, j, k: (i, j, 0, 0)),   # L1 partials
    ]
    out_shape = [
        jax.ShapeDtypeStruct((b, c, 8, 128), jnp.float32),
        jax.ShapeDtypeStruct((b, c, 8, 128), jnp.float32),
    ]
    if with_geo:
        assert latent.shape[0] == b
        in_specs.append(pl.BlockSpec((1, latent.shape[1], latent.shape[2]),
                                     lambda i, j, k: (i, 0, 0)))
        args.append(latent)
        out_specs.append(pl.BlockSpec((1, 1, 8, 128), lambda i, j, k: (i, j, 0, 0)))
        out_shape.append(jax.ShapeDtypeStruct((b, c, 8, 128), jnp.float32))

    flops = 2 * b * c * (h * w * hout + hout * h * hout)
    transcendentals = 0
    if with_geo:
        flops += 2 * b * latent.shape[1] ** 2 * latent.shape[2]
        transcendentals = b * latent.shape[1] ** 2 * 6
    bytes_accessed = (gen_im.size * gen_im.dtype.itemsize
                      + ref_im.size * ref_im.dtype.itemsize
                      + 2 * d_mat_bf16.size * d_mat_bf16.dtype.itemsize
                      + (latent.size * latent.dtype.itemsize if with_geo else 0)
                      + len(out_shape) * b * c * 8 * 128 * 4)

    outs = pl.pallas_call(
        kernel,
        grid=(b, c, nch),
        in_specs=in_specs,
        out_specs=out_specs,
        out_shape=out_shape,
        scratch_shapes=[pltpu.VMEM((hout, hout), jnp.float32)],
        compiler_params=pltpu.CompilerParams(
            dimension_semantics=("parallel", "parallel", "arbitrary"),
            vmem_limit_bytes=16 * 1024 * 1024,
        ),
        cost_estimate=pl.CostEstimate(
            flops=int(flops), transcendentals=int(transcendentals),
            bytes_accessed=int(bytes_accessed)),
    )(*args)

    l2p, l1p = outs[0], outs[1]
    inv_n = 1.0 / float(c * hout * hout)
    # torch: (diff^2).mean((1,2,3)).clamp(min=eps).sum() over batch (L1 with |.| and x10)
    l2 = jnp.sum(jnp.maximum(jnp.sum(l2p[:, :, 0, 0], axis=1) * inv_n, eps))
    l1 = 10.0 * jnp.sum(jnp.maximum(jnp.sum(l1p[:, :, 0, 0], axis=1) * inv_n, eps))
    geo = jnp.sum(outs[2][:, 0, 0, 0]) if with_geo else jnp.float32(0.0)
    return l2, l1, geo


# ------------------------------ LossBuilder ----------------------------------

class LossBuilder:
    def __init__(self, ref_im, loss_str, eps):
        assert ref_im.shape[2] == ref_im.shape[3]
        im_size = ref_im.shape[2]
        factor = 1024 // im_size
        assert im_size * factor == 1024
        d_f32, hout = _build_downsample_matrix(1024, factor)
        assert hout == im_size
        self.d_mat = d_f32.astype(jnp.bfloat16)   # bf16 MXU operands (single-pass)
        self.hout = hout
        self.ref_im = jnp.asarray(ref_im, jnp.float32)
        self.parsed_loss = [t.split("*") for t in loss_str.split("+")]
        self.eps = float(eps)
        loss_types = set(lt for _, lt in self.parsed_loss)
        if "DISC" in loss_types:
            # TODO(synk): DISC loss needs pretrained StyleGAN D_basic weights from a
            # checkpoint; no self-contained Pallas equivalent.
            raise NotImplementedError("DISC loss is not supported in this synthetic kernel")
        self.need_geo = "GEOCROSS" in loss_types

    def __call__(self, latent, gen_im):
        with_geo = self.need_geo and latent.shape[1] != 1
        lat = jnp.asarray(latent, jnp.float32).reshape(-1, 18, 512) if with_geo else None
        # gen_im is consumed in its native dtype (f32 or bf16); bf16 cast for the
        # MXU happens inside the kernel, so no extra HBM pass is incurred here.
        l2, l1, geo = fused_losses(gen_im, self.ref_im, self.d_mat, self.eps, latent=lat)
        loss_vals = {"L2": l2, "L1": l1, "GEOCROSS": geo}
        loss = jnp.float32(0.0)
        losses = {}
        for weight, loss_type in self.parsed_loss:
            tmp_loss = loss_vals[loss_type]
            losses[loss_type] = tmp_loss
            loss = loss + float(weight) * tmp_loss
        return loss, losses


# ---------------------------------- main --------------------------------------

if __name__ == "__main__":
    key = jax.random.PRNGKey(0)
    k_ref, k_gen, k_lat = jax.random.split(key, 3)

    B, C, IM = 2, 3, 64                 # ref_im 64x64 -> factor 16 -> gen_im 1024x1024
    ref_im = jax.random.uniform(k_ref, (B, C, IM, IM), jnp.float32)
    gen_im = jax.random.uniform(k_gen, (B, C, 1024, 1024), jnp.float32)
    latent = jax.random.normal(k_lat, (B, 18, 512), jnp.float32)

    builder = LossBuilder(ref_im, "1*L2+10*L1+0.1*GEOCROSS", eps=1e-3)
    loss, losses = builder(latent, gen_im)
    jax.block_until_ready((loss, losses))

    assert np.isfinite(np.asarray(loss)), "loss is not finite"
    print("KERNEL_OK")
</pallas_src>

<mosaic_0001>
module attributes {stable_mosaic.version = 11 : i64} {
  func.func @_fused_loss_kernel(%arg0: i32, %arg1: i32, %arg2: i32, %arg3: memref<64x1024xbf16, #tpu.memory_space<vmem>>, %arg4: memref<64x256xbf16, #tpu.memory_space<vmem>>, %arg5: memref<1x1x256x1024xf32, #tpu.memory_space<vmem>>, %arg6: memref<1x1x64x64xf32, #tpu.memory_space<vmem>>, %arg7: memref<1x18x512xf32, #tpu.memory_space<vmem>>, %arg8: memref<1x1x8x128xf32, #tpu.memory_space<vmem>>, %arg9: memref<1x1x8x128xf32, #tpu.memory_space<vmem>>, %arg10: memref<1x1x8x128xf32, #tpu.memory_space<vmem>>, %arg11: memref<64x64xf32, #tpu.memory_space<vmem>>) attributes {dimension_semantics = [#tpu.dimension_semantics<parallel>, #tpu.dimension_semantics<parallel>, #tpu.dimension_semantics<arbitrary>], iteration_bounds = array<i64: 2, 3, 4>, scalar_prefetch = 0 : i64, scratch_operands = 1 : i64, tpu.core_type = #tpu.core_type<tc>, window_params = [{pipeline_mode = #tpu.pipeline_mode<synchronous>, transform_indices = @transform_0, window_bounds = array<i64: 64, 1024>}, {transform_indices = @transform_1, window_bounds = array<i64: 64, 256>}, {transform_indices = @transform_2, window_bounds = array<i64: 1, 1, 256, 1024>}, {transform_indices = @transform_3, window_bounds = array<i64: 1, 1, 64, 64>}, {transform_indices = @transform_4, window_bounds = array<i64: 1, 18, 512>}, {transform_indices = @transform_5, window_bounds = array<i64: 1, 1, 8, 128>}, {transform_indices = @transform_6, window_bounds = array<i64: 1, 1, 8, 128>}, {transform_indices = @transform_7, window_bounds = array<i64: 1, 1, 8, 128>}]} {
    %c0_i32 = arith.constant 0 : i32
    %0 = arith.cmpi eq, %arg2, %c0_i32 : i32
    %1 = arith.extui %0 : i1 to i32
    %c0_i32_0 = arith.constant 0 : i32
    %2 = arith.cmpi ne, %1, %c0_i32_0 : i32
    scf.if %2 {
      %cst_17 = arith.constant 0.000000e+00 : f32
      %22 = vector.broadcast %cst_17 : f32 to vector<64x64xf32>
      %c0_18 = arith.constant 0 : index
      %c0_19 = arith.constant 0 : index
      %23 = vector.load %arg11[%c0_18, %c0_19] : memref<64x64xf32, #tpu.memory_space<vmem>>, vector<64x64xf32>
      tpu.vector_store %arg11[%c0_18, %c0_19], %22 {strides = array<i32>} : memref<64x64xf32, #tpu.memory_space<vmem>>, vector<64x64xf32>,
    } else {
    }
    %c0 = arith.constant 0 : index
    %c0_1 = arith.constant 0 : index
    %c0_2 = arith.constant 0 : index
    %c0_3 = arith.constant 0 : index
    %3 = vector.load %arg5[%c0, %c0_1, %c0_2, %c0_3] : memref<1x1x256x1024xf32, #tpu.memory_space<vmem>>, vector<1x1x256x1024xf32>
    %4 = vector.shape_cast %3 : vector<1x1x256x1024xf32> to vector<256x1024xf32>
    %5 = arith.truncf %4 : vector<256x1024xf32> to vector<256x1024xbf16>
    %c0_4 = arith.constant 0 : index
    %c0_5 = arith.constant 0 : index
    %6 = vector.load %arg3[%c0_4, %c0_5] : memref<64x1024xbf16, #tpu.memory_space<vmem>>, vector<64x1024xbf16>
    %cst = arith.constant dense<0.000000e+00> : vector<256x64xf32>
    %7 = tpu.matmul %5, %6, %cst {dimension_numbers = #tpu.dot_dimension_numbers<[1], [1], [0], [0], [0, 0, 1, 0], [], []>} : vector<256x1024xbf16>, vector<64x1024xbf16>, vector<256x64xf32> -> vector<256x64xf32>
    %c0_6 = arith.constant 0 : index
    %c0_7 = arith.constant 0 : index
    %8 = vector.load %arg11[%c0_6, %c0_7] : memref<64x64xf32, #tpu.memory_space<vmem>>, vector<64x64xf32>
    %c0_8 = arith.constant 0 : index
    %c0_9 = arith.constant 0 : index
    %9 = vector.load %arg4[%c0_8, %c0_9] : memref<64x256xbf16, #tpu.memory_space<vmem>>, vector<64x256xbf16>
    %10 = arith.truncf %7 : vector<256x64xf32> to vector<256x64xbf16>
    %cst_10 = arith.constant dense<0.000000e+00> : vector<64x64xf32>
    %11 = tpu.matmul %9, %10, %cst_10 {dimension_numbers = #tpu.dot_dimension_numbers<[1], [0], [0], [1], [0, 0, 1, 1], [], []>} : vector<64x256xbf16>, vector<256x64xbf16>, vector<64x64xf32> -> vector<64x64xf32>
    %12 = arith.addf %8, %11 : vector<64x64xf32>
    %c0_11 = arith.constant 0 : index
    %c0_12 = arith.constant 0 : index
    %13 = vector.load %arg11[%c0_11, %c0_12] : memref<64x64xf32, #tpu.memory_space<vmem>>, vector<64x64xf32>
    tpu.vector_store %arg11[%c0_11, %c0_12], %12 {strides = array<i32>} : memref<64x64xf32, #tpu.memory_space<vmem>>, vector<64x64xf32>,
    %c3_i32 = arith.constant 3 : i32
    %14 = arith.cmpi eq, %arg2, %c3_i32 : i32
    %15 = arith.extui %14 : i1 to i32
    %c0_i32_13 = arith.constant 0 : i32
    %16 = arith.cmpi ne, %15, %c0_i32_13 : i32
    scf.if %16 {
      %c0_17 = arith.constant 0 : index
      %c0_18 = arith.constant 0 : index
      %22 = vector.load %arg11[%c0_17, %c0_18] : memref<64x64xf32, #tpu.memory_space<vmem>>, vector<64x64xf32>
      %c0_19 = arith.constant 0 : index
      %c0_20 = arith.constant 0 : index
      %c0_21 = arith.constant 0 : index
      %c0_22 = arith.constant 0 : index
      %23 = vector.load %arg6[%c0_19, %c0_20, %c0_21, %c0_22] : memref<1x1x64x64xf32, #tpu.memory_space<vmem>>, vector<1x1x64x64xf32>
      %24 = vector.shape_cast %23 : vector<1x1x64x64xf32> to vector<64x64xf32>
      %25 = arith.subf %22, %24 : vector<64x64xf32>
      %26 = arith.mulf %25, %25 : vector<64x64xf32>
      %27 = vector.shape_cast %26 : vector<64x64xf32> to vector<1x64x64xf32>
      %cst_23 = arith.constant dense<0.000000e+00> : vector<1xf32>
      %28 = vector.multi_reduction <add>, %27, %cst_23 [1, 2] : vector<1x64x64xf32> to vector<1xf32>
      %29 = vector.shape_cast %28 : vector<1xf32> to vector<1x1x1xf32>
      %30 = vector.extract %29[0, 0, 0] : f32 from vector<1x1x1xf32>
      %31 = vector.broadcast %30 : f32 to vector<1x1xf32>
      %32 = vector.shape_cast %31 : vector<1x1xf32> to vector<1x1xf32>
      %33 = vector.broadcast %32 : vector<1x1xf32> to vector<8x128xf32>
      %c0_24 = arith.constant 0 : index
      %c0_25 = arith.constant 0 : index
      %c0_26 = arith.constant 0 : index
      %c0_27 = arith.constant 0 : index
      %34 = vector.load %arg8[%c0_24, %c0_25, %c0_26, %c0_27] : memref<1x1x8x128xf32, #tpu.memory_space<vmem>>, vector<1x1x8x128xf32>
      %35 = vector.shape_cast %34 : vector<1x1x8x128xf32> to vector<8x128xf32>
      %36 = vector.shape_cast %33 : vector<8x128xf32> to vector<1x1x8x128xf32>
      tpu.vector_store %arg8[%c0_24, %c0_25, %c0_26, %c0_27], %36 {strides = array<i32>} : memref<1x1x8x128xf32, #tpu.memory_space<vmem>>, vector<1x1x8x128xf32>,
      %37 = math.absf %25 : vector<64x64xf32>
      %38 = vector.shape_cast %37 : vector<64x64xf32> to vector<1x64x64xf32>
      %cst_28 = arith.constant dense<0.000000e+00> : vector<1xf32>
      %39 = vector.multi_reduction <add>, %38, %cst_28 [1, 2] : vector<1x64x64xf32> to vector<1xf32>
      %40 = vector.shape_cast %39 : vector<1xf32> to vector<1x1x1xf32>
      %41 = vector.extract %40[0, 0, 0] : f32 from vector<1x1x1xf32>
      %42 = vector.broadcast %41 : f32 to vector<1x1xf32>
      %43 = vector.shape_cast %42 : vector<1x1xf32> to vector<1x1xf32>
      %44 = vector.broadcast %43 : vector<1x1xf32> to vector<8x128xf32>
      %c0_29 = arith.constant 0 : index
      %c0_30 = arith.constant 0 : index
      %c0_31 = arith.constant 0 : index
      %c0_32 = arith.constant 0 : index
      %45 = vector.load %arg9[%c0_29, %c0_30, %c0_31, %c0_32] : memref<1x1x8x128xf32, #tpu.memory_space<vmem>>, vector<1x1x8x128xf32>
      %46 = vector.shape_cast %45 : vector<1x1x8x128xf32> to vector<8x128xf32>
      %47 = vector.shape_cast %44 : vector<8x128xf32> to vector<1x1x8x128xf32>
      tpu.vector_store %arg9[%c0_29, %c0_30, %c0_31, %c0_32], %47 {strides = array<i32>} : memref<1x1x8x128xf32, #tpu.memory_space<vmem>>, vector<1x1x8x128xf32>,
    } else {
    }
    %c3_i32_14 = arith.constant 3 : i32
    %17 = arith.cmpi eq, %arg2, %c3_i32_14 : i32
    %c0_i32_15 = arith.constant 0 : i32
    %18 = arith.cmpi eq, %arg1, %c0_i32_15 : i32
    %19 = arith.andi %17, %18 : i1
    %20 = arith.extui %19 : i1 to i32
    %c0_i32_16 = arith.constant 0 : i32
    %21 = arith.cmpi ne, %20, %c0_i32_16 : i32
    scf.if %21 {
      %c0_17 = arith.constant 0 : index
      %c0_18 = arith.constant 0 : index
      %c0_19 = arith.constant 0 : index
      %22 = vector.load %arg7[%c0_17, %c0_18, %c0_19] : memref<1x18x512xf32, #tpu.memory_space<vmem>>, vector<1x18x512xf32>
      %23 = vector.shape_cast %22 : vector<1x18x512xf32> to vector<18x512xf32>
      %cst_20 = arith.constant dense<0.000000e+00> : vector<18x18xf32>
      %24 = tpu.matmul %23, %23, %cst_20 {dimension_numbers = #tpu.dot_dimension_numbers<[1], [1], [0], [0], [0, 0, 1, 0], [], []>} : vector<18x512xf32>, vector<18x512xf32>, vector<18x18xf32> -> vector<18x18xf32>
      %25 = tpu.iota {dimensions = array<i32: 0>} : vector<18x18xi32>
      %26 = tpu.iota {dimensions = array<i32: 1>} : vector<18x18xi32>
      %27 = arith.cmpi eq, %25, %26 : vector<18x18xi32>
      %cst_21 = arith.constant 0.000000e+00 : f32
      %28 = vector.broadcast %cst_21 : f32 to vector<18x18xf32>
      %29 = arith.select %27, %24, %28 : vector<18x18xi1>, vector<18x18xf32>
      %cst_22 = arith.constant dense<0.000000e+00> : vector<18xf32>
      %30 = vector.multi_reduction <add>, %29, %cst_22 [1] : vector<18x18xf32> to vector<18xf32>
      %31 = vector.shape_cast %30 : vector<18xf32> to vector<18x1xf32>
      %cst_23 = arith.constant dense<0.000000e+00> : vector<18xf32>
      %32 = vector.multi_reduction <add>, %29, %cst_23 [0] : vector<18x18xf32> to vector<18xf32>
      %33 = vector.shape_cast %32 : vector<18xf32> to vector<1x18xf32>
      %34 = vector.broadcast %31 : vector<18x1xf32> to vector<18x18xf32>
      %35 = vector.broadcast %33 : vector<1x18xf32> to vector<18x18xf32>
      %36 = arith.addf %34, %35 : vector<18x18xf32>
      %cst_24 = arith.constant 2.000000e+00 : f32
      %37 = vector.broadcast %cst_24 : f32 to vector<18x18xf32>
      %38 = arith.mulf %37, %24 : vector<18x18xf32>
      %39 = arith.subf %36, %38 : vector<18x18xf32>
      %cst_25 = arith.constant 0.000000e+00 : f32
      %40 = vector.broadcast %cst_25 : f32 to vector<18x18xf32>
      %41 = arith.maximumf %39, %40 : vector<18x18xf32>
      %42 = vector.broadcast %31 : vector<18x1xf32> to vector<18x18xf32>
      %43 = vector.broadcast %33 : vector<1x18xf32> to vector<18x18xf32>
      %44 = arith.addf %42, %43 : vector<18x18xf32>
      %cst_26 = arith.constant 2.000000e+00 : f32
      %45 = vector.broadcast %cst_26 : f32 to vector<18x18xf32>
      %46 = arith.mulf %45, %24 : vector<18x18xf32>
      %47 = arith.addf %44, %46 : vector<18x18xf32>
      %cst_27 = arith.constant 0.000000e+00 : f32
      %48 = vector.broadcast %cst_27 : f32 to vector<18x18xf32>
      %49 = arith.maximumf %47, %48 : vector<18x18xf32>
      %cst_28 = arith.constant 9.99999971E-10 : f32
      %50 = vector.broadcast %cst_28 : f32 to vector<18x18xf32>
      %51 = arith.addf %41, %50 : vector<18x18xf32>
      %52 = math.sqrt %51 : vector<18x18xf32>
      %cst_29 = arith.constant 9.99999971E-10 : f32
      %53 = vector.broadcast %cst_29 : f32 to vector<18x18xf32>
      %54 = arith.addf %49, %53 : vector<18x18xf32>
      %55 = math.sqrt %54 : vector<18x18xf32>
      %56 = tpu.reciprocal %55 {approx = true} : vector<18x18xf32> -> vector<18x18xf32>
      %57 = arith.mulf %52, %56 : vector<18x18xf32>
      %cst_30 = arith.constant 2.41421366 : f32
      %58 = vector.broadcast %cst_30 : f32 to vector<18x18xf32>
      %59 = arith.cmpf ogt, %57, %58 : vector<18x18xf32>
      %cst_31 = arith.constant 0.414213568 : f32
      %60 = vector.broadcast %cst_31 : f32 to vector<18x18xf32>
      %61 = arith.cmpf ogt, %57, %60 : vector<18x18xf32>
      %62 = tpu.reciprocal %57 {approx = true} : vector<18x18xf32> -> vector<18x18xf32>
      %cst_32 = arith.constant 0.000000e+00 : f32
      %63 = vector.broadcast %cst_32 : f32 to vector<18x18xf32>
      %64 = arith.subf %63, %62 : vector<18x18xf32>
      %cst_33 = arith.constant 1.000000e+00 : f32
      %65 = vector.broadcast %cst_33 : f32 to vector<18x18xf32>
      %66 = arith.subf %57, %65 : vector<18x18xf32>
      %cst_34 = arith.constant 1.000000e+00 : f32
      %67 = vector.broadcast %cst_34 : f32 to vector<18x18xf32>
      %68 = arith.addf %57, %67 : vector<18x18xf32>
      %69 = tpu.reciprocal %68 {approx = true} : vector<18x18xf32> -> vector<18x18xf32>
      %70 = arith.mulf %66, %69 : vector<18x18xf32>
      %71 = arith.select %61, %70, %57 : vector<18x18xi1>, vector<18x18xf32>
      %72 = arith.select %59, %64, %71 : vector<18x18xi1>, vector<18x18xf32>
      %cst_35 = arith.constant 0.785398185 : f32
      %cst_36 = arith.constant 0.000000e+00 : f32
      %73 = vector.broadcast %cst_35 : f32 to vector<18x18xf32>
      %74 = vector.broadcast %cst_36 : f32 to vector<18x18xf32>
      %75 = arith.select %61, %73, %74 : vector<18x18xi1>, vector<18x18xf32>
      %cst_37 = arith.constant 1.57079637 : f32
      %76 = vector.broadcast %cst_37 : f32 to vector<18x18xf32>
      %77 = arith.select %59, %76, %75 : vector<18x18xi1>, vector<18x18xf32>
      %78 = arith.mulf %72, %72 : vector<18x18xf32>
      %cst_38 = arith.constant 0.0805374458 : f32
      %79 = vector.broadcast %cst_38 : f32 to vector<18x18xf32>
      %80 = arith.mulf %79, %78 : vector<18x18xf32>
      %cst_39 = arith.constant 0.138776854 : f32
      %81 = vector.broadcast %cst_39 : f32 to vector<18x18xf32>
      %82 = arith.subf %80, %81 : vector<18x18xf32>
      %83 = arith.mulf %82, %78 : vector<18x18xf32>
      %cst_40 = arith.constant 0.199777111 : f32
      %84 = vector.broadcast %cst_40 : f32 to vector<18x18xf32>
      %85 = arith.addf %83, %84 : vector<18x18xf32>
      %86 = arith.mulf %85, %78 : vector<18x18xf32>
      %cst_41 = arith.constant 0.333329499 : f32
      %87 = vector.broadcast %cst_41 : f32 to vector<18x18xf32>
      %88 = arith.subf %86, %87 : vector<18x18xf32>
      %89 = arith.mulf %88, %78 : vector<18x18xf32>
      %90 = arith.mulf %89, %72 : vector<18x18xf32>
      %91 = arith.addf %90, %72 : vector<18x18xf32>
      %92 = arith.addf %77, %91 : vector<18x18xf32>
      %cst_42 = arith.constant 2.000000e+00 : f32
      %93 = vector.broadcast %cst_42 : f32 to vector<18x18xf32>
      %94 = arith.mulf %93, %92 : vector<18x18xf32>
      %95 = arith.mulf %94, %94 : vector<18x18xf32>
      %96 = vector.shape_cast %95 : vector<18x18xf32> to vector<1x18x18xf32>
      %cst_43 = arith.constant dense<0.000000e+00> : vector<1xf32>
      %97 = vector.multi_reduction <add>, %96, %cst_43 [1, 2] : vector<1x18x18xf32> to vector<1xf32>
      %98 = vector.shape_cast %97 : vector<1xf32> to vector<1x1x1xf32>
      %99 = vector.extract %98[0, 0, 0] : f32 from vector<1x1x1xf32>
      %100 = vector.broadcast %99 : f32 to vector<1x1xf32>
      %cst_44 = arith.constant 0.197530866 : f32
      %101 = vector.broadcast %cst_44 : f32 to vector<1x1xf32>
      %102 = arith.mulf %100, %101 : vector<1x1xf32>
      %103 = vector.shape_cast %102 : vector<1x1xf32> to vector<1x1xf32>
      %104 = vector.broadcast %103 : vector<1x1xf32> to vector<8x128xf32>
      %c0_45 = arith.constant 0 : index
      %c0_46 = arith.constant 0 : index
      %c0_47 = arith.constant 0 : index
      %c0_48 = arith.constant 0 : index
      %105 = vector.load %arg10[%c0_45, %c0_46, %c0_47, %c0_48] : memref<1x1x8x128xf32, #tpu.memory_space<vmem>>, vector<1x1x8x128xf32>
      %106 = vector.shape_cast %105 : vector<1x1x8x128xf32> to vector<8x128xf32>
      %107 = vector.shape_cast %104 : vector<8x128xf32> to vector<1x1x8x128xf32>
      tpu.vector_store %arg10[%c0_45, %c0_46, %c0_47, %c0_48], %107 {strides = array<i32>} : memref<1x1x8x128xf32, #tpu.memory_space<vmem>>, vector<1x1x8x128xf32>,
    } else {
    }
    return
  }
  func.func @transform_0(%arg0: i32, %arg1: i32, %arg2: i32) -> (i32, i32) {
    %c0_i32 = arith.constant 0 : i32
    %c0_i32_0 = arith.constant 0 : i32
    %c0_i32_1 = arith.constant 0 : i32
    return %c0_i32, %c0_i32_0 : i32, i32
  }
  func.func @transform_1(%arg0: i32, %arg1: i32, %arg2: i32) -> (i32, i32) {
    %c0_i32 = arith.constant 0 : i32
    %c0_i32_0 = arith.constant 0 : i32
    return %c0_i32, %arg2 : i32, i32
  }
  func.func @transform_2(%arg0: i32, %arg1: i32, %arg2: i32) -> (i32, i32, i32, i32) {
    %c0_i32 = arith.constant 0 : i32
    %c0_i32_0 = arith.constant 0 : i32
    return %arg0, %arg1, %arg2, %c0_i32 : i32, i32, i32, i32
  }
  func.func @transform_3(%arg0: i32, %arg1: i32, %arg2: i32) -> (i32, i32, i32, i32) {
    %c0_i32 = arith.constant 0 : i32
    %c0_i32_0 = arith.constant 0 : i32
    %c0_i32_1 = arith.constant 0 : i32
    return %arg0, %arg1, %c0_i32, %c0_i32_0 : i32, i32, i32, i32
  }
  func.func @transform_4(%arg0: i32, %arg1: i32, %arg2: i32) -> (i32, i32, i32) {
    %c0_i32 = arith.constant 0 : i32
    %c0_i32_0 = arith.constant 0 : i32
    %c0_i32_1 = arith.constant 0 : i32
    return %arg0, %c0_i32, %c0_i32_0 : i32, i32, i32
  }
  func.func @transform_5(%arg0: i32, %arg1: i32, %arg2: i32) -> (i32, i32, i32, i32) {
    %c0_i32 = arith.constant 0 : i32
    %c0_i32_0 = arith.constant 0 : i32
    %c0_i32_1 = arith.constant 0 : i32
    return %arg0, %arg1, %c0_i32, %c0_i32_0 : i32, i32, i32, i32
  }
  func.func @transform_6(%arg0: i32, %arg1: i32, %arg2: i32) -> (i32, i32, i32, i32) {
    %c0_i32 = arith.constant 0 : i32
    %c0_i32_0 = arith.constant 0 : i32
    %c0_i32_1 = arith.constant 0 : i32
    return %arg0, %arg1, %c0_i32, %c0_i32_0 : i32, i32, i32, i32
  }
  func.func @transform_7(%arg0: i32, %arg1: i32, %arg2: i32) -> (i32, i32, i32, i32) {
    %c0_i32 = arith.constant 0 : i32
    %c0_i32_0 = arith.constant 0 : i32
    %c0_i32_1 = arith.constant 0 : i32
    return %arg0, %arg1, %c0_i32, %c0_i32_0 : i32, i32, i32, i32
  }
}

</mosaic_0001>

<llo_original>
// kernel: tpu_custom_call.1
$region0: #{tpu_custom_call.1}
  #allocation0 [shape = 'u32[]', space=smem, size = 0x4, offset = 0x4, fixed_abs, tag = 'smem constant byte address 0x4 - core index']
  #allocation1 [shape = 'u32[72,128]{1,0:T(1,128)}', space=vmem, size = 0x9000, scoped, tag = 'internal scratch']
  #allocation2 [shape = 'f32[64,64]{1,0:T(8,128)}', space=vmem, size = 0x8000, scoped, tag = 'scratch operand']
  %s0 = inlined_call_operand.hbm [shape: bf16[64,1024], index: 0, kind: input, shape index: {}]
  %s1 = inlined_call_operand.hbm [shape: bf16[64,1024], index: 1, kind: input, shape index: {}]
  %s2 = inlined_call_operand.hbm [shape: f32[2,3,1024,1024], index: 2, kind: input, shape index: {}]
  %s3 = inlined_call_operand.hbm [shape: f32[2,3,64,64], index: 3, kind: input, shape index: {}]
  %s4 = inlined_call_operand.vmem [shape: f32[2,18,512], index: 4, kind: input, shape index: {}]
  %s5 = inlined_call_operand.hbm [shape: f32[2,3,8,128], index: 5, kind: output, shape index: {0}]
  %s6 = inlined_call_operand.hbm [shape: f32[2,3,8,128], index: 6, kind: output, shape index: {1}]
  %s7 = inlined_call_operand.hbm [shape: f32[2,3,8,128], index: 7, kind: output, shape index: {2}]
  %8 = xla_tuple %s5, %s6, %s7
  %s9 = sld [smem:[#allocation0]]
  $region97: #{tpu_custom_call.1} parent=0
    _
  %s11 = ssub.s32 1, %s9
  %s12 = scalar_select 0, %s11, %s9
  $region1: #{tpu_custom_call.1} parent=0
    #allocation3 [shape = 'u8[131072]{0}', space=vmem, size = 0x20000, scoped, tag = 'input window, operand 0, single buffered']
    #allocation4 [shape = 's32[2]{0}', space=sflag, size = 0x8, scoped, tag = 'scoped memory for tpu_custom_call.1']
    #allocation5 [shape = 's32[2]{0}', space=sflag, size = 0x8, scoped, tag = 'scoped memory for tpu_custom_call.1']
    #allocation6 [shape = 'u8[65536]{0}', space=vmem, size = 0x10000, scoped, tag = 'input window, operand 1']
    #allocation7 [shape = 's32[2]{0}', space=sflag, size = 0x8, scoped, tag = 'scoped memory for tpu_custom_call.1']
    #allocation8 [shape = 'u8[2097152]{0}', space=vmem, size = 0x200000, scoped, tag = 'input window, operand 2']
    #allocation9 [shape = 'u8[65536]{0}', space=vmem, size = 0x10000, scoped, tag = 'input window, operand 3']
    #allocation10 [shape = 's32[2]{0}', space=sflag, size = 0x8, scoped, tag = 'scoped memory for tpu_custom_call.1']
    #allocation11 [shape = 'u8[8192]{0}', space=vmem, size = 0x2000, scoped, tag = 'output window, operand 0']
    #allocation12 [shape = 'u8[8192]{0}', space=vmem, size = 0x2000, scoped, tag = 'output window, operand 1']
    #allocation13 [shape = 's32[2]{0}', space=sflag, size = 0x8, scoped, tag = 'scoped memory for tpu_custom_call.1']
    #allocation14 [shape = 'u8[8192]{0}', space=vmem, size = 0x2000, scoped, tag = 'output window, operand 2']
    %13 = vsyncpa [#allocation4], 0
    %14 = vsyncpa [#allocation7], 0
    %s15 = scalar_lea.sflag [#allocation7], 1
    %16 = vsyncpa %s15, 0
    %17 = vsyncpa [#allocation10], 0
    %s18 = scalar_lea.sflag [#allocation10], 1
    %19 = vsyncpa %s18, 0
    %20 = vsyncpa [#allocation5], 0
    %s21 = scalar_lea.sflag [#allocation5], 1
    %22 = vsyncpa %s21, 0
    %23 = vsyncpa [#allocation13], 0
    %s24 = scalar_lea.sflag [#allocation13], 1
    %25 = vsyncpa %s24, 0
    loop: start=0, step=1, limit=26
    $region2: #{tpu_custom_call.1} parent=1 // loop_pre_header
      _
    $region3: #{tpu_custom_call.1} parent=1 // loop_header
      %s27 = sphi 0, %s31
      %p28 = scmp.ge.s32.totalorder %s27, 26
      %s34 = sphi 0, %s53
      %s35 = sphi 0, %s49
      %s36 = sphi 0, %s45
      %s37 = sphi 0, %s34
      %s38 = sphi 0, %s35
      %s39 = sphi 0, %s36
      %s40 = sphi 0, %s37
      %s41 = sphi 0, %s38
      %s42 = sphi 0, %s39
      %s54 = sphi 0, %s54
      %s56 = sphi 0, %s54
      %s57 = sphi 0, %s56
      %s71 = sphi 0, %s57
      %s77 = sphi 0, %s79
      %s80 = sphi 0, %s77
      %s81 = sphi 0, %s80
      %s97 = sphi 0, %s81
      %s107 = sphi 0, %s109
      %s110 = sphi 0, %s107
      %s111 = sphi 0, %s110
      %s127 = sphi 0, %s111
      %s135 = sphi 0, %s137
      %s138 = sphi 0, %s135
      %s139 = sphi 0, %s138
      %s155 = sphi 0, %s139
      %s161 = sphi 0, %s163
      %s164 = sphi 0, %s161
      %s165 = sphi 0, %s164
      %s181 = sphi 0, %s165
      %s189 = sphi 0, %s191
      %s192 = sphi 0, %s189
      %s193 = sphi 0, %s192
      %s209 = sphi 0, %s193
      %s217 = sphi 0, %s219
      %s220 = sphi 0, %s217
      %s221 = sphi 0, %s220
      %s237 = sphi 0, %s221
      %s245 = sphi 0, %s247
      %s248 = sphi 0, %s245
      %s249 = sphi 0, %s248
      %s265 = sphi 0, %s249
    $region4: #{tpu_custom_call.1} parent=1 // loop_header_branch
      %30 = sbr.rel (%p28) target = $region8
    $region5: #{tpu_custom_call.1} parent=1 // loop_body
      %s32 = ssub.s32 %s27, 1
      %s33 = ssub.s32 %s27, 2
      %s43 = sadd.s32 1, %s36
      %p44 = scmp.ge.s32.totalorder %s43, 4
      %s45 = scalar_select %p44, 0, %s43
      %s46 = sadd.s32 1, %s35
      %s47 = scalar_select %p44, %s46, %s35
      %p48 = scmp.ge.s32.totalorder %s47, 3
      %s49 = scalar_select %p48, 0, %s47
      %s50 = sadd.s32 1, %s34
      %s51 = scalar_select %p48, %s50, %s34
      %p52 = scmp.ge.s32.totalorder %s51, 2
      %s53 = scalar_select %p52, 0, %s51
      %s55 = sadd.s32 %s54, 1
      %p58 = scmp.eq.s32.totalorder %s27, 23
      %p59 = scmp.ne.s32.totalorder %s54, %s56
      %p60 = scmp.eq.s32.totalorder %s27, 0
      %p61 = por %p59, %p60
      %p62 = scmp.ne.s32.totalorder %s54, %s56
      %p63 = scmp.eq.s32.totalorder %s32, 23
      %p64 = por %p62, %p63
      %p65 = scmp.ne.s32.totalorder %s56, %s57
      %p66 = scmp.eq.s32.totalorder %s32, 0
      %p67 = por %p65, %p66
      %p68 = scmp.ne.s32.totalorder %s56, %s57
      %p69 = scmp.eq.s32.totalorder %s33, 23
      %p70 = por %p68, %p69
      %p72 = scmp.ne.s32.totalorder %s57, %s71
      %p73 = scmp.eq.s32.totalorder %s33, 0
      %p74 = por %p72, %p73
      %s75 = ssub.s32 %s36, %s45
      %p76 = scmp.eq.s32.totalorder %s75, 0
      %s78 = sadd.s32 %s77, 1
      %s79 = scalar_select %p76, %s77, %s78
      %p82 = pneg %p76
      %p83 = scmp.eq.s32.totalorder %s27, 23
      %p84 = por %p82, %p83
      %p85 = scmp.ne.s32.totalorder %s77, %s80
      %p86 = scmp.eq.s32.totalorder %s27, 0
      %p87 = por %p85, %p86
      %p88 = scmp.ne.s32.totalorder %s77, %s80
      %p89 = scmp.eq.s32.totalorder %s32, 23
      %p90 = por %p88, %p89
      %p91 = scmp.ne.s32.totalorder %s80, %s81
      %p92 = scmp.eq.s32.totalorder %s32, 0
      %p93 = por %p91, %p92
      %p94 = scmp.ne.s32.totalorder %s80, %s81
      %p95 = scmp.eq.s32.totalorder %s33, 23
      %p96 = por %p94, %p95
      %p98 = scmp.ne.s32.totalorder %s81, %s97
      %p99 = scmp.eq.s32.totalorder %s33, 0
      %p100 = por %p98, %p99
      %s101 = ssub.s32 %s34, %s53
      %s102 = ssub.s32 %s35, %s49
      %s103 = sor.u32 %s101, %s102
      %s104 = ssub.s32 %s36, %s45
      %s105 = sor.u32 %s103, %s104
      %p106 = scmp.eq.s32.totalorder %s105, 0
      %s108 = sadd.s32 %s107, 1
      %s109 = scalar_select %p106, %s107, %s108
      %p112 = pneg %p106
      %p113 = scmp.eq.s32.totalorder %s27, 23
      %p114 = por %p112, %p113
      %p115 = scmp.ne.s32.totalorder %s107, %s110
      %p116 = scmp.eq.s32.totalorder %s27, 0
      %p117 = por %p115, %p116
      %p118 = scmp.ne.s32.totalorder %s107, %s110
      %p119 = scmp.eq.s32.totalorder %s32, 23
      %p120 = por %p118, %p119
      %p121 = scmp.ne.s32.totalorder %s110, %s111
      %p122 = scmp.eq.s32.totalorder %s32, 0
      %p123 = por %p121, %p122
      %p124 = scmp.ne.s32.totalorder %s110, %s111
      %p125 = scmp.eq.s32.totalorder %s33, 23
      %p126 = por %p124, %p125
      %p128 = scmp.ne.s32.totalorder %s111, %s127
      %p129 = scmp.eq.s32.totalorder %s33, 0
      %p130 = por %p128, %p129
      %s131 = ssub.s32 %s34, %s53
      %s132 = ssub.s32 %s35, %s49
      %s133 = sor.u32 %s131, %s132
      %p134 = scmp.eq.s32.totalorder %s133, 0
      %s136 = sadd.s32 %s135, 1
      %s137 = scalar_select %p134, %s135, %s136
      %p140 = pneg %p134
      %p141 = scmp.eq.s32.totalorder %s27, 23
      %p142 = por %p140, %p141
      %p143 = scmp.ne.s32.totalorder %s135, %s138
      %p144 = scmp.eq.s32.totalorder %s27, 0
      %p145 = por %p143, %p144
      %p146 = scmp.ne.s32.totalorder %s135, %s138
      %p147 = scmp.eq.s32.totalorder %s32, 23
      %p148 = por %p146, %p147
      %p149 = scmp.ne.s32.totalorder %s138, %s139
      %p150 = scmp.eq.s32.totalorder %s32, 0
      %p151 = por %p149, %p150
      %p152 = scmp.ne.s32.totalorder %s138, %s139
      %p153 = scmp.eq.s32.totalorder %s33, 23
      %p154 = por %p152, %p153
      %p156 = scmp.ne.s32.totalorder %s139, %s155
      %p157 = scmp.eq.s32.totalorder %s33, 0
      %p158 = por %p156, %p157
      %s159 = ssub.s32 %s34, %s53
      %p160 = scmp.eq.s32.totalorder %s159, 0
      %s162 = sadd.s32 %s161, 1
      %s163 = scalar_select %p160, %s161, %s162
      %p166 = pneg %p160
      %p167 = scmp.eq.s32.totalorder %s27, 23
      %p168 = por %p166, %p167
      %p169 = scmp.ne.s32.totalorder %s161, %s164
      %p170 = scmp.eq.s32.totalorder %s27, 0
      %p171 = por %p169, %p170
      %p172 = scmp.ne.s32.totalorder %s161, %s164
      %p173 = scmp.eq.s32.totalorder %s32, 23
      %p174 = por %p172, %p173
      %p175 = scmp.ne.s32.totalorder %s164, %s165
      %p176 = scmp.eq.s32.totalorder %s32, 0
      %p177 = por %p175, %p176
      %p178 = scmp.ne.s32.totalorder %s164, %s165
      %p179 = scmp.eq.s32.totalorder %s33, 23
      %p180 = por %p178, %p179
      %p182 = scmp.ne.s32.totalorder %s165, %s181
      %p183 = scmp.eq.s32.totalorder %s33, 0
      %p184 = por %p182, %p183
      %s185 = ssub.s32 %s34, %s53
      %s186 = ssub.s32 %s35, %s49
      %s187 = sor.u32 %s185, %s186
      %p188 = scmp.eq.s32.totalorder %s187, 0
      %s190 = sadd.s32 %s189, 1
      %s191 = scalar_select %p188, %s189, %s190
      %p194 = pneg %p188
      %p195 = scmp.eq.s32.totalorder %s27, 23
      %p196 = por %p194, %p195
      %p197 = scmp.ne.s32.totalorder %s189, %s192
      %p198 = scmp.eq.s32.totalorder %s27, 0
      %p199 = por %p197, %p198
      %p200 = scmp.ne.s32.totalorder %s189, %s192
      %p201 = scmp.eq.s32.totalorder %s32, 23
      %p202 = por %p200, %p201
      %p203 = scmp.ne.s32.totalorder %s192, %s193
      %p204 = scmp.eq.s32.totalorder %s32, 0
      %p205 = por %p203, %p204
      %p206 = scmp.ne.s32.totalorder %s192, %s193
      %p207 = scmp.eq.s32.totalorder %s33, 23
      %p208 = por %p206, %p207
      %p210 = scmp.ne.s32.totalorder %s193, %s209
      %p211 = scmp.eq.s32.totalorder %s33, 0
      %p212 = por %p210, %p211
      %s213 = ssub.s32 %s34, %s53
      %s214 = ssub.s32 %s35, %s49
      %s215 = sor.u32 %s213, %s214
      %p216 = scmp.eq.s32.totalorder %s215, 0
      %s218 = sadd.s32 %s217, 1
      %s219 = scalar_select %p216, %s217, %s218
      %p222 = pneg %p216
      %p223 = scmp.eq.s32.totalorder %s27, 23
      %p224 = por %p222, %p223
      %p225 = scmp.ne.s32.totalorder %s217, %s220
      %p226 = scmp.eq.s32.totalorder %s27, 0
      %p227 = por %p225, %p226
      %p228 = scmp.ne.s32.totalorder %s217, %s220
      %p229 = scmp.eq.s32.totalorder %s32, 23
      %p230 = por %p228, %p229
      %p231 = scmp.ne.s32.totalorder %s220, %s221
      %p232 = scmp.eq.s32.totalorder %s32, 0
      %p233 = por %p231, %p232
      %p234 = scmp.ne.s32.totalorder %s220, %s221
      %p235 = scmp.eq.s32.totalorder %s33, 23
      %p236 = por %p234, %p235
      %p238 = scmp.ne.s32.totalorder %s221, %s237
      %p239 = scmp.eq.s32.totalorder %s33, 0
      %p240 = por %p238, %p239
      %s241 = ssub.s32 %s34, %s53
      %s242 = ssub.s32 %s35, %s49
      %s243 = sor.u32 %s241, %s242
      %p244 = scmp.eq.s32.totalorder %s243, 0
      %s246 = sadd.s32 %s245, 1
      %s247 = scalar_select %p244, %s245, %s246
      %p250 = pneg %p244
      %p251 = scmp.eq.s32.totalorder %s27, 23
      %p252 = por %p250, %p251
      %p253 = scmp.ne.s32.totalorder %s245, %s248
      %p254 = scmp.eq.s32.totalorder %s27, 0
      %p255 = por %p253, %p254
      %p256 = scmp.ne.s32.totalorder %s245, %s248
      %p257 = scmp.eq.s32.totalorder %s32, 23
      %p258 = por %p256, %p257
      %p259 = scmp.ne.s32.totalorder %s248, %s249
      %p260 = scmp.eq.s32.totalorder %s32, 0
      %p261 = por %p259, %p260
      %p262 = scmp.ne.s32.totalorder %s248, %s249
      %p263 = scmp.eq.s32.totalorder %s33, 23
      %p264 = por %p262, %p263
      %p266 = scmp.ne.s32.totalorder %s249, %s265
      %p267 = scmp.eq.s32.totalorder %s33, 0
      %p268 = por %p266, %p267
      %p269 = scmp.le.s32.totalorder 1, %s27
      %p270 = scmp.lt.s32.totalorder %s27, 25
      %p271 = pnand %p269, %p270
      %p272 = pneg %p271
      // Predicated region
      $region9: #{tpu_custom_call.1} parent=5 // pred_check
        _
      $region10: #{tpu_custom_call.1} parent=5 // pred_check_branch
        %274 = sbr.rel (%p271) target = $region12
      $region11: #{tpu_custom_call.1} parent=5 // pred_region
        %s275 = ssub.s32 %s27, 1
        // Predicated region
        $region13: #{tpu_custom_call.1} parent=11 // pred_check
          %p276 = pneg %p67
        $region14: #{tpu_custom_call.1} parent=11 // pred_check_branch
          %278 = sbr.rel (%p276) target = $region16
        $region15: #{tpu_custom_call.1} parent=11 // pred_region
          %280 = vsyncadd [#allocation4], 0
          %s281 = sshll.u32 %s0, 4
          %s282 = int_to_ptr.hbm [resolvable:$true] %s281
          %s283 = sshll.u32 [#allocation3], 4
          %s284 = int_to_ptr.vmem [resolvable:$true] %s283
          %289 = dma.hbm_to_vmem [thread:$0]  %s282, 4096, %s284, [#allocation4], 512, 512, 32
        $region16: #{tpu_custom_call.1} parent=11 // pred_fallthru
          _
      $region12: #{tpu_custom_call.1} parent=5 // pred_fallthru
        _
      %p290 = scmp.lt.s32.totalorder %s27, 24
      // Predicated region
      $region17: #{tpu_custom_call.1} parent=5 // pred_check
        %p291 = pneg %p290
      $region18: #{tpu_custom_call.1} parent=5 // pred_check_branch
        %293 = sbr.rel (%p291) target = $region20
      $region19: #{tpu_custom_call.1} parent=5 // pred_region
        // Predicated region
        $region21: #{tpu_custom_call.1} parent=19 // pred_check
          %p294 = pneg %p87
        $region22: #{tpu_custom_call.1} parent=19 // pred_check_branch
          %296 = sbr.rel (%p294) target = $region24
        $region23: #{tpu_custom_call.1} parent=19 // pred_region
          %s297 = sand.u32 %s27, 1
          %s298 = scalar_lea.sflag [#allocation7], %s297
          %s299 = sand.u32 %s77, 1
          %s300 = smul.addr %s299, 64
          %s301 = scalar_lea.vmem [#allocation6], %s300
          %s302 = smul.u32 2, %s36
          %304 = vsyncadd %s298, 0
          %s305 = smul.addr %s302, 4
          %s306 = scalar_lea.hbm %s1, %s305
          %s307 = sshll.u32 %s306, 4
          %s308 = int_to_ptr.hbm [resolvable:$true] %s307
          %s309 = sshll.u32 %s301, 4
          %s310 = int_to_ptr.vmem [resolvable:$true] %s309
          %315 = dma.hbm_to_vmem [thread:$0]  %s308, 1024, %s310, %s298, 512, 128, 8
        $region24: #{tpu_custom_call.1} parent=19 // pred_fallthru
          _
        // Predicated region
        $region25: #{tpu_custom_call.1} parent=19 // pred_check
          %p316 = pneg %p117
        $region26: #{tpu_custom_call.1} parent=19 // pred_check_branch
          %318 = sbr.rel (%p316) target = $region28
        $region27: #{tpu_custom_call.1} parent=19 // pred_region
          %s319 = sand.u32 %s27, 1
          %s320 = scalar_lea.sflag [#allocation7], %s319
          %s321 = sand.u32 %s107, 1
          %s322 = smul.addr %s321, 2048
          %s323 = scalar_lea.vmem [#allocation8], %s322
          %s324 = smul.u32 32, %s36
          %326 = vsyncadd %s320, 0
          %s327 = smul.addr %s324, 8
          %s328 = smul.addr %s35, 1024
          %s329 = sadd.s32 %s327, %s328
          %s330 = smul.addr %s34, 3072
          %s331 = sadd.s32 %s329, %s330
          %s332 = smul.addr %s331, 8
          %s333 = scalar_lea.hbm %s2, %s332
          %s334 = sshll.u32 %s333, 4
          %s335 = int_to_ptr.hbm [resolvable:$true] %s334
          %s336 = sshll.u32 %s323, 4
          %s337 = int_to_ptr.vmem [resolvable:$true] %s336
          %342 = dma.hbm_to_vmem [thread:$0]  %s335, 32768, %s337, %s320, 1024, 1024, 64
        $region28: #{tpu_custom_call.1} parent=19 // pred_fallthru
          _
        // Predicated region
        $region29: #{tpu_custom_call.1} parent=19 // pred_check
          %p343 = pneg %p145
        $region30: #{tpu_custom_call.1} parent=19 // pred_check_branch
          %345 = sbr.rel (%p343) target = $region32
        $region31: #{tpu_custom_call.1} parent=19 // pred_region
          %s346 = sand.u32 %s135, 1
          %s347 = scalar_lea.sflag [#allocation10], %s346
          %s348 = sand.u32 %s135, 1
          %s349 = smul.addr %s348, 64
          %s350 = scalar_lea.vmem [#allocation9], %s349
          %352 = vsyncadd %s347, 0
          %s353 = smul.addr %s35, 8
          %s354 = smul.addr %s34, 24
          %s355 = sadd.s32 %s353, %s354
          %s356 = smul.addr %s355, 8
          %s357 = scalar_lea.hbm %s3, %s356
          %s358 = sshll.u32 %s357, 4
          %s359 = int_to_ptr.hbm [resolvable:$true] %s358
          %s360 = sshll.u32 %s350, 4
          %s361 = int_to_ptr.vmem [resolvable:$true] %s360
          %366 = dma.hbm_to_vmem [thread:$0]  %s359, 1024, %s361, %s347, 128, 128, 8
        $region32: #{tpu_custom_call.1} parent=19 // pred_fallthru
          _
        // Predicated region
        $region33: #{tpu_custom_call.1} parent=19 // pred_check
          %p367 = pneg %p171
        $region34: #{tpu_custom_call.1} parent=19 // pred_check_branch
          %369 = sbr.rel (%p367) target = $region36
        $region35: #{tpu_custom_call.1} parent=19 // pred_region
          %p370 = scmp.lt.s32.totalorder %s34, 1
          %s371 = scalar_select %p370, %s34, 1
          %s372 = smul.addr %s371, 12
          %s373 = smul.addr %s372, 8
          %s374 = scalar_lea.vmem %s4, %s373
        $region36: #{tpu_custom_call.1} parent=19 // pred_fallthru
          _
      $region20: #{tpu_custom_call.1} parent=5 // pred_fallthru
        _
      %p375 = scmp.le.s32.totalorder 1, %s27
      %p376 = scmp.lt.s32.totalorder %s27, 25
      %p377 = pnand %p375, %p376
      %p378 = pneg %p377
      // Predicated region
      $region37: #{tpu_custom_call.1} parent=5 // pred_check
        _
      $region38: #{tpu_custom_call.1} parent=5 // pred_check_branch
        %380 = sbr.rel (%p377) target = $region40
      $region39: #{tpu_custom_call.1} parent=5 // pred_region
        %s381 = ssub.s32 %s27, 1
        // Predicated region
        $region41: #{tpu_custom_call.1} parent=39 // pred_check
          %p382 = pneg %p67
        $region42: #{tpu_custom_call.1} parent=39 // pred_check_branch
          %384 = sbr.rel (%p382) target = $region44
        $region43: #{tpu_custom_call.1} parent=39 // pred_region
          %386 = dma.done [#allocation4], 4096
        $region44: #{tpu_custom_call.1} parent=39 // pred_fallthru
          _
        %s387 = sand.u32 %s32, 1
        %s388 = scalar_lea.sflag [#allocation7], %s387
        %s389 = sand.u32 %s80, 1
        %s390 = smul.addr %s389, 64
        %s391 = scalar_lea.vmem [#allocation6], %s390
        // Predicated region
        $region45: #{tpu_custom_call.1} parent=39 // pred_check
          %p392 = pneg %p93
        $region46: #{tpu_custom_call.1} parent=39 // pred_check_branch
          %394 = sbr.rel (%p392) target = $region48
        $region47: #{tpu_custom_call.1} parent=39 // pred_region
          %396 = dma.done %s388, 1024
        $region48: #{tpu_custom_call.1} parent=39 // pred_fallthru
          _
        %s397 = sand.u32 %s32, 1
        %s398 = scalar_lea.sflag [#allocation7], %s397
        %s399 = sand.u32 %s110, 1
        %s400 = smul.addr %s399, 2048
        %s401 = scalar_lea.vmem [#allocation8], %s400
        // Predicated region
        $region49: #{tpu_custom_call.1} parent=39 // pred_check
          %p402 = pneg %p123
        $region50: #{tpu_custom_call.1} parent=39 // pred_check_branch
          %404 = sbr.rel (%p402) target = $region52
        $region51: #{tpu_custom_call.1} parent=39 // pred_region
          %406 = dma.done %s398, 32768
        $region52: #{tpu_custom_call.1} parent=39 // pred_fallthru
          _
        %s407 = sand.u32 %s138, 1
        %s408 = scalar_lea.sflag [#allocation10], %s407
        %s409 = sand.u32 %s138, 1
        %s410 = smul.addr %s409, 64
        %s411 = scalar_lea.vmem [#allocation9], %s410
        // Predicated region
        $region53: #{tpu_custom_call.1} parent=39 // pred_check
          %p412 = pneg %p151
        $region54: #{tpu_custom_call.1} parent=39 // pred_check_branch
          %414 = sbr.rel (%p412) target = $region56
        $region55: #{tpu_custom_call.1} parent=39 // pred_region
          %416 = dma.done %s408, 1024
        $region56: #{tpu_custom_call.1} parent=39 // pred_fallthru
          _
        %p417 = pneg %p67
        %p418 = pneg %p64
        %s419 = sand.u32 %s32, 1
        %s420 = scalar_lea.sflag [#allocation7], %s419
        %s421 = sand.u32 %s80, 1
        %s422 = smul.addr %s421, 64
        %s423 = scalar_lea.vmem [#allocation6], %s422
        %p424 = pneg %p93
        %p425 = pneg %p90
        %s426 = sand.u32 %s32, 1
        %s427 = scalar_lea.sflag [#allocation7], %s426
        %s428 = sand.u32 %s110, 1
        %s429 = smul.addr %s428, 2048
        %s430 = scalar_lea.vmem [#allocation8], %s429
        %p431 = pneg %p123
        %p432 = pneg %p120
        %s433 = sand.u32 %s138, 1
        %s434 = scalar_lea.sflag [#allocation10], %s433
        %s435 = sand.u32 %s138, 1
        %s436 = smul.addr %s435, 64
        %s437 = scalar_lea.vmem [#allocation9], %s436
        %p438 = pneg %p151
        %p439 = pneg %p148
        %p440 = scmp.lt.s32.totalorder %s37, 1
        %s441 = scalar_select %p440, %s37, 1
        %s442 = smul.addr %s441, 12
        %s443 = smul.addr %s442, 8
        %s444 = scalar_lea.vmem %s4, %s443
        %p445 = pneg %p177
        %p446 = pneg %p174
        %p447 = pneg %p205
        %p448 = pneg %p202
        %s449 = sand.u32 %s192, 1
        %s450 = scalar_lea.sflag [#allocation5], %s449
        %s451 = sand.u32 %s192, 1
        %s452 = smul.addr %s451, 8
        %s453 = scalar_lea.vmem [#allocation11], %s452
        %p454 = pneg %p233
        %p455 = pneg %p230
        %s456 = sand.u32 %s32, 1
        %s457 = scalar_lea.sflag [#allocation13], %s456
        %s458 = sand.u32 %s220, 1
        %s459 = smul.addr %s458, 8
        %s460 = scalar_lea.vmem [#allocation12], %s459
        %p461 = pneg %p261
        %p462 = pneg %p258
        %s463 = sand.u32 %s32, 1
        %s464 = scalar_lea.sflag [#allocation13], %s463
        %s465 = sand.u32 %s248, 1
        %s466 = smul.addr %s465, 8
        %s467 = scalar_lea.vmem [#allocation14], %s466
        %s468 = smul.u32 2, %s39
        %s469 = smul.u32 32, %s39
        %p470 = scmp.lt.s32.totalorder %s37, 1
        %s471 = scalar_select %p470, %s37, 1
        %s472 = smul.addr %s471, 12
        %s473 = smul.addr %s472, 8
        %s474 = scalar_lea.vmem %s4, %s473
        %p476 = scmp.eq.s32.totalorder %s39, 0
        // Predicated region
        $region57: #{tpu_custom_call.1} parent=39 // pred_check
          %p477 = pneg %p476
        $region58: #{tpu_custom_call.1} parent=39 // pred_check_branch
          %479 = sbr.rel (%p477) target = $region60
        $region59: #{tpu_custom_call.1} parent=39 // pred_region
          %vm480 = vcmask 523264
          %481 = vst.msk [vmem:[#allocation2] sm:$0xff] %vm480, 0.0
          %482 = vst.msk [vmem:[#allocation2 + $0x8] sm:$0xff] %vm480, 0.0
          %483 = vst.msk [vmem:[#allocation2 + $0x10] sm:$0xff] %vm480, 0.0
          %484 = vst.msk [vmem:[#allocation2 + $0x18] sm:$0xff] %vm480, 0.0
          %485 = vst.msk [vmem:[#allocation2 + $0x20] sm:$0xff] %vm480, 0.0
          %486 = vst.msk [vmem:[#allocation2 + $0x28] sm:$0xff] %vm480, 0.0
          %487 = vst.msk [vmem:[#allocation2 + $0x30] sm:$0xff] %vm480, 0.0
          %488 = vst.msk [vmem:[#allocation2 + $0x38] sm:$0xff] %vm480, 0.0
        $region60: #{tpu_custom_call.1} parent=39 // pred_fallthru
          _
        %v489 = vld [vmem:[%s401] sm:$0xff]
        %v490 = vld [vmem:[%s401 + $0x8] sm:$0xff]
        %v491 = vld [vmem:[%s401 + $0x10] sm:$0xff]
        %v492 = vld [vmem:[%s401 + $0x18] sm:$0xff]
        %v493 = vld [vmem:[%s401 + $0x20] sm:$0xff]
        %v494 = vld [vmem:[%s401 + $0x28] sm:$0xff]
        %v495 = vld [vmem:[%s401 + $0x30] sm:$0xff]
        %v496 = vld [vmem:[%s401 + $0x38] sm:$0xff]
        %v497 = vld [vmem:[%s401 + $0x40] sm:$0xff]
        %v498 = vld [vmem:[%s401 + $0x48] sm:$0xff]
        %v499 = vld [vmem:[%s401 + $0x50] sm:$0xff]
        %v500 = vld [vmem:[%s401 + $0x58] sm:$0xff]
        %v501 = vld [vmem:[%s401 + $0x60] sm:$0xff]
        %v502 = vld [vmem:[%s401 + $0x68] sm:$0xff]
        %v503 = vld [vmem:[%s401 + $0x70] sm:$0xff]
        %v504 = vld [vmem:[%s401 + $0x78] sm:$0xff]
        %v505 = vld [vmem:[%s401 + $0x80] sm:$0xff]
        %v506 = vld [vmem:[%s401 + $0x88] sm:$0xff]
        %v507 = vld [vmem:[%s401 + $0x90] sm:$0xff]
        %v508 = vld [vmem:[%s401 + $0x98] sm:$0xff]
        %v509 = vld [vmem:[%s401 + $0xa0] sm:$0xff]
        %v510 = vld [vmem:[%s401 + $0xa8] sm:$0xff]
        %v511 = vld [vmem:[%s401 + $0xb0] sm:$0xff]
        %v512 = vld [vmem:[%s401 + $0xb8] sm:$0xff]
        %v513 = vld [vmem:[%s401 + $0xc0] sm:$0xff]
        %v514 = vld [vmem:[%s401 + $0xc8] sm:$0xff]
        %v515 = vld [vmem:[%s401 + $0xd0] sm:$0xff]
        %v516 = vld [vmem:[%s401 + $0xd8] sm:$0xff]
        %v517 = vld [vmem:[%s401 + $0xe0] sm:$0xff]
        %v518 = vld [vmem:[%s401 + $0xe8] sm:$0xff]
        %v519 = vld [vmem:[%s401 + $0xf0] sm:$0xff]
        %v520 = vld [vmem:[%s401 + $0xf8] sm:$0xff]
        %v521 = vld [vmem:[%s401 + $0x100] sm:$0xff]
        %v522 = vld [vmem:[%s401 + $0x108] sm:$0xff]
        %v523 = vld [vmem:[%s401 + $0x110] sm:$0xff]
        %v524 = vld [vmem:[%s401 + $0x118] sm:$0xff]
        %v525 = vld [vmem:[%s401 + $0x120] sm:$0xff]
        %v526 = vld [vmem:[%s401 + $0x128] sm:$0xff]
        %v527 = vld [vmem:[%s401 + $0x130] sm:$0xff]
        %v528 = vld [vmem:[%s401 + $0x138] sm:$0xff]
        %v529 = vld [vmem:[%s401 + $0x140] sm:$0xff]
        %v530 = vld [vmem:[%s401 + $0x148] sm:$0xff]
        %v531 = vld [vmem:[%s401 + $0x150] sm:$0xff]
        %v532 = vld [vmem:[%s401 + $0x158] sm:$0xff]
        %v533 = vld [vmem:[%s401 + $0x160] sm:$0xff]
        %v534 = vld [vmem:[%s401 + $0x168] sm:$0xff]
        %v535 = vld [vmem:[%s401 + $0x170] sm:$0xff]
        %v536 = vld [vmem:[%s401 + $0x178] sm:$0xff]
        %v537 = vld [vmem:[%s401 + $0x180] sm:$0xff]
        %v538 = vld [vmem:[%s401 + $0x188] sm:$0xff]
        %v539 = vld [vmem:[%s401 + $0x190] sm:$0xff]
        %v540 = vld [vmem:[%s401 + $0x198] sm:$0xff]
        %v541 = vld [vmem:[%s401 + $0x1a0] sm:$0xff]
        %v542 = vld [vmem:[%s401 + $0x1a8] sm:$0xff]
        %v543 = vld [vmem:[%s401 + $0x1b0] sm:$0xff]
        %v544 = vld [vmem:[%s401 + $0x1b8] sm:$0xff]
        %v545 = vld [vmem:[%s401 + $0x1c0] sm:$0xff]
        %v546 = vld [vmem:[%s401 + $0x1c8] sm:$0xff]
        %v547 = vld [vmem:[%s401 + $0x1d0] sm:$0xff]
        %v548 = vld [vmem:[%s401 + $0x1d8] sm:$0xff]
        %v549 = vld [vmem:[%s401 + $0x1e0] sm:$0xff]
        %v550 = vld [vmem:[%s401 + $0x1e8] sm:$0xff]
        %v551 = vld [vmem:[%s401 + $0x1f0] sm:$0xff]
        %v552 = vld [vmem:[%s401 + $0x1f8] sm:$0xff]
        %v553 = vld [vmem:[%s401 + $0x200] sm:$0xff]
        %v554 = vld [vmem:[%s401 + $0x208] sm:$0xff]
        %v555 = vld [vmem:[%s401 + $0x210] sm:$0xff]
        %v556 = vld [vmem:[%s401 + $0x218] sm:$0xff]
        %v557 = vld [vmem:[%s401 + $0x220] sm:$0xff]
        %v558 = vld [vmem:[%s401 + $0x228] sm:$0xff]
        %v559 = vld [vmem:[%s401 + $0x230] sm:$0xff]
        %v560 = vld [vmem:[%s401 + $0x238] sm:$0xff]
        %v561 = vld [vmem:[%s401 + $0x240] sm:$0xff]
        %v562 = vld [vmem:[%s401 + $0x248] sm:$0xff]
        %v563 = vld [vmem:[%s401 + $0x250] sm:$0xff]
        %v564 = vld [vmem:[%s401 + $0x258] sm:$0xff]
        %v565 = vld [vmem:[%s401 + $0x260] sm:$0xff]
        %v566 = vld [vmem:[%s401 + $0x268] sm:$0xff]
        %v567 = vld [vmem:[%s401 + $0x270] sm:$0xff]
        %v568 = vld [vmem:[%s401 + $0x278] sm:$0xff]
        %v569 = vld [vmem:[%s401 + $0x280] sm:$0xff]
        %v570 = vld [vmem:[%s401 + $0x288] sm:$0xff]
        %v571 = vld [vmem:[%s401 + $0x290] sm:$0xff]
        %v572 = vld [vmem:[%s401 + $0x298] sm:$0xff]
        %v573 = vld [vmem:[%s401 + $0x2a0] sm:$0xff]
        %v574 = vld [vmem:[%s401 + $0x2a8] sm:$0xff]
        %v575 = vld [vmem:[%s401 + $0x2b0] sm:$0xff]
        %v576 = vld [vmem:[%s401 + $0x2b8] sm:$0xff]
        %v577 = vld [vmem:[%s401 + $0x2c0] sm:$0xff]
        %v578 = vld [vmem:[%s401 + $0x2c8] sm:$0xff]
        %v579 = vld [vmem:[%s401 + $0x2d0] sm:$0xff]
        %v580 = vld [vmem:[%s401 + $0x2d8] sm:$0xff]
        %v581 = vld [vmem:[%s401 + $0x2e0] sm:$0xff]
        %v582 = vld [vmem:[%s401 + $0x2e8] sm:$0xff]
        %v583 = vld [vmem:[%s401 + $0x2f0] sm:$0xff]
        %v584 = vld [vmem:[%s401 + $0x2f8] sm:$0xff]
        %v585 = vld [vmem:[%s401 + $0x300] sm:$0xff]
        %v586 = vld [vmem:[%s401 + $0x308] sm:$0xff]
        %v587 = vld [vmem:[%s401 + $0x310] sm:$0xff]
        %v588 = vld [vmem:[%s401 + $0x318] sm:$0xff]
        %v589 = vld [vmem:[%s401 + $0x320] sm:$0xff]
        %v590 = vld [vmem:[%s401 + $0x328] sm:$0xff]
        %v591 = vld [vmem:[%s401 + $0x330] sm:$0xff]
        %v592 = vld [vmem:[%s401 + $0x338] sm:$0xff]
        %v593 = vld [vmem:[%s401 + $0x340] sm:$0xff]
        %v594 = vld [vmem:[%s401 + $0x348] sm:$0xff]
        %v595 = vld [vmem:[%s401 + $0x350] sm:$0xff]
        %v596 = vld [vmem:[%s401 + $0x358] sm:$0xff]
        %v597 = vld [vmem:[%s401 + $0x360] sm:$0xff]
        %v598 = vld [vmem:[%s401 + $0x368] sm:$0xff]
        %v599 = vld [vmem:[%s401 + $0x370] sm:$0xff]
        %v600 = vld [vmem:[%s401 + $0x378] sm:$0xff]
        %v601 = vld [vmem:[%s401 + $0x380] sm:$0xff]
        %v602 = vld [vmem:[%s401 + $0x388] sm:$0xff]
        %v603 = vld [vmem:[%s401 + $0x390] sm:$0xff]
        %v604 = vld [vmem:[%s401 + $0x398] sm:$0xff]
        %v605 = vld [vmem:[%s401 + $0x3a0] sm:$0xff]
        %v606 = vld [vmem:[%s401 + $0x3a8] sm:$0xff]
        %v607 = vld [vmem:[%s401 + $0x3b0] sm:$0xff]
        %v608 = vld [vmem:[%s401 + $0x3b8] sm:$0xff]
        %v609 = vld [vmem:[%s401 + $0x3c0] sm:$0xff]
        %v610 = vld [vmem:[%s401 + $0x3c8] sm:$0xff]
        %v611 = vld [vmem:[%s401 + $0x3d0] sm:$0xff]
        %v612 = vld [vmem:[%s401 + $0x3d8] sm:$0xff]
        %v613 = vld [vmem:[%s401 + $0x3e0] sm:$0xff]
        %v614 = vld [vmem:[%s401 + $0x3e8] sm:$0xff]
        %v615 = vld [vmem:[%s401 + $0x3f0] sm:$0xff]
        %v616 = vld [vmem:[%s401 + $0x3f8] sm:$0xff]
        %v617 = vld [vmem:[%s401 + $0x400] sm:$0xff]
        %v618 = vld [vmem:[%s401 + $0x408] sm:$0xff]
        %v619 = vld [vmem:[%s401 + $0x410] sm:$0xff]
        %v620 = vld [vmem:[%s401 + $0x418] sm:$0xff]
        %v621 = vld [vmem:[%s401 + $0x420] sm:$0xff]
        %v622 = vld [vmem:[%s401 + $0x428] sm:$0xff]
        %v623 = vld [vmem:[%s401 + $0x430] sm:$0xff]
        %v624 = vld [vmem:[%s401 + $0x438] sm:$0xff]
        %v625 = vld [vmem:[%s401 + $0x440] sm:$0xff]
        %v626 = vld [vmem:[%s401 + $0x448] sm:$0xff]
        %v627 = vld [vmem:[%s401 + $0x450] sm:$0xff]
        %v628 = vld [vmem:[%s401 + $0x458] sm:$0xff]
        %v629 = vld [vmem:[%s401 + $0x460] sm:$0xff]
        %v630 = vld [vmem:[%s401 + $0x468] sm:$0xff]
        %v631 = vld [vmem:[%s401 + $0x470] sm:$0xff]
        %v632 = vld [vmem:[%s401 + $0x478] sm:$0xff]
        %v633 = vld [vmem:[%s401 + $0x480] sm:$0xff]
        %v634 = vld [vmem:[%s401 + $0x488] sm:$0xff]
        %v635 = vld [vmem:[%s401 + $0x490] sm:$0xff]
        %v636 = vld [vmem:[%s401 + $0x498] sm:$0xff]
        %v637 = vld [vmem:[%s401 + $0x4a0] sm:$0xff]
        %v638 = vld [vmem:[%s401 + $0x4a8] sm:$0xff]
        %v639 = vld [vmem:[%s401 + $0x4b0] sm:$0xff]
        %v640 = vld [vmem:[%s401 + $0x4b8] sm:$0xff]
        %v641 = vld [vmem:[%s401 + $0x4c0] sm:$0xff]
        %v642 = vld [vmem:[%s401 + $0x4c8] sm:$0xff]
        %v643 = vld [vmem:[%s401 + $0x4d0] sm:$0xff]
        %v644 = vld [vmem:[%s401 + $0x4d8] sm:$0xff]
        %v645 = vld [vmem:[%s401 + $0x4e0] sm:$0xff]
        %v646 = vld [vmem:[%s401 + $0x4e8] sm:$0xff]
        %v647 = vld [vmem:[%s401 + $0x4f0] sm:$0xff]
        %v648 = vld [vmem:[%s401 + $0x4f8] sm:$0xff]
        %v649 = vld [vmem:[%s401 + $0x500] sm:$0xff]
        %v650 = vld [vmem:[%s401 + $0x508] sm:$0xff]
        %v651 = vld [vmem:[%s401 + $0x510] sm:$0xff]
        %v652 = vld [vmem:[%s401 + $0x518] sm:$0xff]
        %v653 = vld [vmem:[%s401 + $0x520] sm:$0xff]
        %v654 = vld [vmem:[%s401 + $0x528] sm:$0xff]
        %v655 = vld [vmem:[%s401 + $0x530] sm:$0xff]
        %v656 = vld [vmem:[%s401 + $0x538] sm:$0xff]
        %v657 = vld [vmem:[%s401 + $0x540] sm:$0xff]
        %v658 = vld [vmem:[%s401 + $0x548] sm:$0xff]
        %v659 = vld [vmem:[%s401 + $0x550] sm:$0xff]
        %v660 = vld [vmem:[%s401 + $0x558] sm:$0xff]
        %v661 = vld [vmem:[%s401 + $0x560] sm:$0xff]
        %v662 = vld [vmem:[%s401 + $0x568] sm:$0xff]
        %v663 = vld [vmem:[%s401 + $0x570] sm:$0xff]
        %v664 = vld [vmem:[%s401 + $0x578] sm:$0xff]
        %v665 = vld [vmem:[%s401 + $0x580] sm:$0xff]
        %v666 = vld [vmem:[%s401 + $0x588] sm:$0xff]
        %v667 = vld [vmem:[%s401 + $0x590] sm:$0xff]
        %v668 = vld [vmem:[%s401 + $0x598] sm:$0xff]
        %v669 = vld [vmem:[%s401 + $0x5a0] sm:$0xff]
        %v670 = vld [vmem:[%s401 + $0x5a8] sm:$0xff]
        %v671 = vld [vmem:[%s401 + $0x5b0] sm:$0xff]
        %v672 = vld [vmem:[%s401 + $0x5b8] sm:$0xff]
        %v673 = vld [vmem:[%s401 + $0x5c0] sm:$0xff]
        %v674 = vld [vmem:[%s401 + $0x5c8] sm:$0xff]
        %v675 = vld [vmem:[%s401 + $0x5d0] sm:$0xff]
        %v676 = vld [vmem:[%s401 + $0x5d8] sm:$0xff]
        %v677 = vld [vmem:[%s401 + $0x5e0] sm:$0xff]
        %v678 = vld [vmem:[%s401 + $0x5e8] sm:$0xff]
        %v679 = vld [vmem:[%s401 + $0x5f0] sm:$0xff]
        %v680 = vld [vmem:[%s401 + $0x5f8] sm:$0xff]
        %v681 = vld [vmem:[%s401 + $0x600] sm:$0xff]
        %v682 = vld [vmem:[%s401 + $0x608] sm:$0xff]
        %v683 = vld [vmem:[%s401 + $0x610] sm:$0xff]
        %v684 = vld [vmem:[%s401 + $0x618] sm:$0xff]
        %v685 = vld [vmem:[%s401 + $0x620] sm:$0xff]
        %v686 = vld [vmem:[%s401 + $0x628] sm:$0xff]
        %v687 = vld [vmem:[%s401 + $0x630] sm:$0xff]
        %v688 = vld [vmem:[%s401 + $0x638] sm:$0xff]
        %v689 = vld [vmem:[%s401 + $0x640] sm:$0xff]
        %v690 = vld [vmem:[%s401 + $0x648] sm:$0xff]
        %v691 = vld [vmem:[%s401 + $0x650] sm:$0xff]
        %v692 = vld [vmem:[%s401 + $0x658] sm:$0xff]
        %v693 = vld [vmem:[%s401 + $0x660] sm:$0xff]
        %v694 = vld [vmem:[%s401 + $0x668] sm:$0xff]
        %v695 = vld [vmem:[%s401 + $0x670] sm:$0xff]
        %v696 = vld [vmem:[%s401 + $0x678] sm:$0xff]
        %v697 = vld [vmem:[%s401 + $0x680] sm:$0xff]
        %v698 = vld [vmem:[%s401 + $0x688] sm:$0xff]
        %v699 = vld [vmem:[%s401 + $0x690] sm:$0xff]
        %v700 = vld [vmem:[%s401 + $0x698] sm:$0xff]
        %v701 = vld [vmem:[%s401 + $0x6a0] sm:$0xff]
        %v702 = vld [vmem:[%s401 + $0x6a8] sm:$0xff]
        %v703 = vld [vmem:[%s401 + $0x6b0] sm:$0xff]
        %v704 = vld [vmem:[%s401 + $0x6b8] sm:$0xff]
        %v705 = vld [vmem:[%s401 + $0x6c0] sm:$0xff]
        %v706 = vld [vmem:[%s401 + $0x6c8] sm:$0xff]
        %v707 = vld [vmem:[%s401 + $0x6d0] sm:$0xff]
        %v708 = vld [vmem:[%s401 + $0x6d8] sm:$0xff]
        %v709 = vld [vmem:[%s401 + $0x6e0] sm:$0xff]
        %v710 = vld [vmem:[%s401 + $0x6e8] sm:$0xff]
        %v711 = vld [vmem:[%s401 + $0x6f0] sm:$0xff]
        %v712 = vld [vmem:[%s401 + $0x6f8] sm:$0xff]
        %v713 = vld [vmem:[%s401 + $0x700] sm:$0xff]
        %v714 = vld [vmem:[%s401 + $0x708] sm:$0xff]
        %v715 = vld [vmem:[%s401 + $0x710] sm:$0xff]
        %v716 = vld [vmem:[%s401 + $0x718] sm:$0xff]
        %v717 = vld [vmem:[%s401 + $0x720] sm:$0xff]
        %v718 = vld [vmem:[%s401 + $0x728] sm:$0xff]
        %v719 = vld [vmem:[%s401 + $0x730] sm:$0xff]
        %v720 = vld [vmem:[%s401 + $0x738] sm:$0xff]
        %v721 = vld [vmem:[%s401 + $0x740] sm:$0xff]
        %v722 = vld [vmem:[%s401 + $0x748] sm:$0xff]
        %v723 = vld [vmem:[%s401 + $0x750] sm:$0xff]
        %v724 = vld [vmem:[%s401 + $0x758] sm:$0xff]
        %v725 = vld [vmem:[%s401 + $0x760] sm:$0xff]
        %v726 = vld [vmem:[%s401 + $0x768] sm:$0xff]
        %v727 = vld [vmem:[%s401 + $0x770] sm:$0xff]
        %v728 = vld [vmem:[%s401 + $0x778] sm:$0xff]
        %v729 = vld [vmem:[%s401 + $0x780] sm:$0xff]
        %v730 = vld [vmem:[%s401 + $0x788] sm:$0xff]
        %v731 = vld [vmem:[%s401 + $0x790] sm:$0xff]
        %v732 = vld [vmem:[%s401 + $0x798] sm:$0xff]
        %v733 = vld [vmem:[%s401 + $0x7a0] sm:$0xff]
        %v734 = vld [vmem:[%s401 + $0x7a8] sm:$0xff]
        %v735 = vld [vmem:[%s401 + $0x7b0] sm:$0xff]
        %v736 = vld [vmem:[%s401 + $0x7b8] sm:$0xff]
        %v737 = vld [vmem:[%s401 + $0x7c0] sm:$0xff]
        %v738 = vld [vmem:[%s401 + $0x7c8] sm:$0xff]
        %v739 = vld [vmem:[%s401 + $0x7d0] sm:$0xff]
        %v740 = vld [vmem:[%s401 + $0x7d8] sm:$0xff]
        %v741 = vld [vmem:[%s401 + $0x7e0] sm:$0xff]
        %v742 = vld [vmem:[%s401 + $0x7e8] sm:$0xff]
        %v743 = vld [vmem:[%s401 + $0x7f0] sm:$0xff]
        %v744 = vld [vmem:[%s401 + $0x7f8] sm:$0xff]
        %v745 = vpack.c.bf16 %v497, %v489
        %v746 = vpack.c.bf16 %v498, %v490
        %v747 = vpack.c.bf16 %v499, %v491
        %v748 = vpack.c.bf16 %v500, %v492
        %v749 = vpack.c.bf16 %v501, %v493
        %v750 = vpack.c.bf16 %v502, %v494
        %v751 = vpack.c.bf16 %v503, %v495
        %v752 = vpack.c.bf16 %v504, %v496
        %v753 = vpack.c.bf16 %v513, %v505
        %v754 = vpack.c.bf16 %v514, %v506
        %v755 = vpack.c.bf16 %v515, %v507
        %v756 = vpack.c.bf16 %v516, %v508
        %v757 = vpack.c.bf16 %v517, %v509
        %v758 = vpack.c.bf16 %v518, %v510
        %v759 = vpack.c.bf16 %v519, %v511
        %v760 = vpack.c.bf16 %v520, %v512
        %v761 = vpack.c.bf16 %v529, %v521
        %v762 = vpack.c.bf16 %v530, %v522
        %v763 = vpack.c.bf16 %v531, %v523
        %v764 = vpack.c.bf16 %v532, %v524
        %v765 = vpack.c.bf16 %v533, %v525
        %v766 = vpack.c.bf16 %v534, %v526
        %v767 = vpack.c.bf16 %v535, %v527
        %v768 = vpack.c.bf16 %v536, %v528
        %v769 = vpack.c.bf16 %v545, %v537
        %v770 = vpack.c.bf16 %v546, %v538
        %v771 = vpack.c.bf16 %v547, %v539
        %v772 = vpack.c.bf16 %v548, %v540
        %v773 = vpack.c.bf16 %v549, %v541
        %v774 = vpack.c.bf16 %v550, %v542
        %v775 = vpack.c.bf16 %v551, %v543
        %v776 = vpack.c.bf16 %v552, %v544
        %v777 = vpack.c.bf16 %v561, %v553
        %v778 = vpack.c.bf16 %v562, %v554
        %v779 = vpack.c.bf16 %v563, %v555
        %v780 = vpack.c.bf16 %v564, %v556
        %v781 = vpack.c.bf16 %v565, %v557
        %v782 = vpack.c.bf16 %v566, %v558
        %v783 = vpack.c.bf16 %v567, %v559
        %v784 = vpack.c.bf16 %v568, %v560
        %v785 = vpack.c.bf16 %v577, %v569
        %v786 = vpack.c.bf16 %v578, %v570
        %v787 = vpack.c.bf16 %v579, %v571
        %v788 = vpack.c.bf16 %v580, %v572
        %v789 = vpack.c.bf16 %v581, %v573
        %v790 = vpack.c.bf16 %v582, %v574
        %v791 = vpack.c.bf16 %v583, %v575
        %v792 = vpack.c.bf16 %v584, %v576
        %v793 = vpack.c.bf16 %v593, %v585
        %v794 = vpack.c.bf16 %v594, %v586
        %v795 = vpack.c.bf16 %v595, %v587
        %v796 = vpack.c.bf16 %v596, %v588
        %v797 = vpack.c.bf16 %v597, %v589
        %v798 = vpack.c.bf16 %v598, %v590
        %v799 = vpack.c.bf16 %v599, %v591
        %v800 = vpack.c.bf16 %v600, %v592
        %v801 = vpack.c.bf16 %v609, %v601
        %v802 = vpack.c.bf16 %v610, %v602
        %v803 = vpack.c.bf16 %v611, %v603
        %v804 = vpack.c.bf16 %v612, %v604
        %v805 = vpack.c.bf16 %v613, %v605
        %v806 = vpack.c.bf16 %v614, %v606
        %v807 = vpack.c.bf16 %v615, %v607
        %v808 = vpack.c.bf16 %v616, %v608
        %v809 = vpack.c.bf16 %v625, %v617
        %v810 = vpack.c.bf16 %v626, %v618
        %v811 = vpack.c.bf16 %v627, %v619
        %v812 = vpack.c.bf16 %v628, %v620
        %v813 = vpack.c.bf16 %v629, %v621
        %v814 = vpack.c.bf16 %v630, %v622
        %v815 = vpack.c.bf16 %v631, %v623
        %v816 = vpack.c.bf16 %v632, %v624
        %v817 = vpack.c.bf16 %v641, %v633
        %v818 = vpack.c.bf16 %v642, %v634
        %v819 = vpack.c.bf16 %v643, %v635
        %v820 = vpack.c.bf16 %v644, %v636
        %v821 = vpack.c.bf16 %v645, %v637
        %v822 = vpack.c.bf16 %v646, %v638
        %v823 = vpack.c.bf16 %v647, %v639
        %v824 = vpack.c.bf16 %v648, %v640
        %v825 = vpack.c.bf16 %v657, %v649
        %v826 = vpack.c.bf16 %v658, %v650
        %v827 = vpack.c.bf16 %v659, %v651
        %v828 = vpack.c.bf16 %v660, %v652
        %v829 = vpack.c.bf16 %v661, %v653
        %v830 = vpack.c.bf16 %v662, %v654
        %v831 = vpack.c.bf16 %v663, %v655
        %v832 = vpack.c.bf16 %v664, %v656
        %v833 = vpack.c.bf16 %v673, %v665
        %v834 = vpack.c.bf16 %v674, %v666
        %v835 = vpack.c.bf16 %v675, %v667
        %v836 = vpack.c.bf16 %v676, %v668
        %v837 = vpack.c.bf16 %v677, %v669
        %v838 = vpack.c.bf16 %v678, %v670
        %v839 = vpack.c.bf16 %v679, %v671
        %v840 = vpack.c.bf16 %v680, %v672
        %v841 = vpack.c.bf16 %v689, %v681
        %v842 = vpack.c.bf16 %v690, %v682
        %v843 = vpack.c.bf16 %v691, %v683
        %v844 = vpack.c.bf16 %v692, %v684
        %v845 = vpack.c.bf16 %v693, %v685
        %v846 = vpack.c.bf16 %v694, %v686
        %v847 = vpack.c.bf16 %v695, %v687
        %v848 = vpack.c.bf16 %v696, %v688
        %v849 = vpack.c.bf16 %v705, %v697
        %v850 = vpack.c.bf16 %v706, %v698
        %v851 = vpack.c.bf16 %v707, %v699
        %v852 = vpack.c.bf16 %v708, %v700
        %v853 = vpack.c.bf16 %v709, %v701
        %v854 = vpack.c.bf16 %v710, %v702
        %v855 = vpack.c.bf16 %v711, %v703
        %v856 = vpack.c.bf16 %v712, %v704
        %v857 = vpack.c.bf16 %v721, %v713
        %v858 = vpack.c.bf16 %v722, %v714
        %v859 = vpack.c.bf16 %v723, %v715
        %v860 = vpack.c.bf16 %v724, %v716
        %v861 = vpack.c.bf16 %v725, %v717
        %v862 = vpack.c.bf16 %v726, %v718
        %v863 = vpack.c.bf16 %v727, %v719
        %v864 = vpack.c.bf16 %v728, %v720
        %v865 = vpack.c.bf16 %v737, %v729
        %v866 = vpack.c.bf16 %v738, %v730
        %v867 = vpack.c.bf16 %v739, %v731
        %v868 = vpack.c.bf16 %v740, %v732
        %v869 = vpack.c.bf16 %v741, %v733
        %v870 = vpack.c.bf16 %v742, %v734
        %v871 = vpack.c.bf16 %v743, %v735
        %v872 = vpack.c.bf16 %v744, %v736
        %v873 = vld [vmem:[#allocation3] sm:$0xff]
        %v874 = vld [vmem:[#allocation3 + $0x8] sm:$0xff]
        %v875 = vld [vmem:[#allocation3 + $0x10] sm:$0xff]
        %v876 = vld [vmem:[#allocation3 + $0x18] sm:$0xff]
        %v877 = vld [vmem:[#allocation3 + $0x20] sm:$0xff]
        %v878 = vld [vmem:[#allocation3 + $0x28] sm:$0xff]
        %v879 = vld [vmem:[#allocation3 + $0x30] sm:$0xff]
        %v880 = vld [vmem:[#allocation3 + $0x38] sm:$0xff]
        %v881 = vld [vmem:[#allocation3 + $0x40] sm:$0xff]
        %v882 = vld [vmem:[#allocation3 + $0x48] sm:$0xff]
        %v883 = vld [vmem:[#allocation3 + $0x50] sm:$0xff]
        %v884 = vld [vmem:[#allocation3 + $0x58] sm:$0xff]
        %v885 = vld [vmem:[#allocation3 + $0x60] sm:$0xff]
        %v886 = vld [vmem:[#allocation3 + $0x68] sm:$0xff]
        %v887 = vld [vmem:[#allocation3 + $0x70] sm:$0xff]
        %v888 = vld [vmem:[#allocation3 + $0x78] sm:$0xff]
        %v889 = vld [vmem:[#allocation3 + $0x80] sm:$0xff]
        %v890 = vld [vmem:[#allocation3 + $0x88] sm:$0xff]
        %v891 = vld [vmem:[#allocation3 + $0x90] sm:$0xff]
        %v892 = vld [vmem:[#allocation3 + $0x98] sm:$0xff]
        %v893 = vld [vmem:[#allocation3 + $0xa0] sm:$0xff]
        %v894 = vld [vmem:[#allocation3 + $0xa8] sm:$0xff]
        %v895 = vld [vmem:[#allocation3 + $0xb0] sm:$0xff]
        %v896 = vld [vmem:[#allocation3 + $0xb8] sm:$0xff]
        %v897 = vld [vmem:[#allocation3 + $0xc0] sm:$0xff]
        %v898 = vld [vmem:[#allocation3 + $0xc8] sm:$0xff]
        %v899 = vld [vmem:[#allocation3 + $0xd0] sm:$0xff]
        %v900 = vld [vmem:[#allocation3 + $0xd8] sm:$0xff]
        %v901 = vld [vmem:[#allocation3 + $0xe0] sm:$0xff]
        %v902 = vld [vmem:[#allocation3 + $0xe8] sm:$0xff]
        %v903 = vld [vmem:[#allocation3 + $0xf0] sm:$0xff]
        %v904 = vld [vmem:[#allocation3 + $0xf8] sm:$0xff]
        %v937 = vunpack.c.l.b16 %v873
        %v938 = vunpack.c.h.b16 %v873
        %v939 = vunpack.c.l.b16 %v874
        %v940 = vunpack.c.h.b16 %v874
        %v941 = vunpack.c.l.b16 %v875
        %v942 = vunpack.c.h.b16 %v875
        %v943 = vunpack.c.l.b16 %v876
        %v944 = vunpack.c.h.b16 %v876
        %v945 = vunpack.c.l.b16 %v877
        %v946 = vunpack.c.h.b16 %v877
        %v947 = vunpack.c.l.b16 %v878
        %v948 = vunpack.c.h.b16 %v878
        %v949 = vunpack.c.l.b16 %v879
        %v950 = vunpack.c.h.b16 %v879
        %v951 = vunpack.c.l.b16 %v880
        %v952 = vunpack.c.h.b16 %v880
        %v953 = vunpack.c.l.b16 %v881
        %v954 = vunpack.c.h.b16 %v881
        %v955 = vunpack.c.l.b16 %v882
        %v956 = vunpack.c.h.b16 %v882
        %v957 = vunpack.c.l.b16 %v883
        %v958 = vunpack.c.h.b16 %v883
        %v959 = vunpack.c.l.b16 %v884
        %v960 = vunpack.c.h.b16 %v884
        %v961 = vunpack.c.l.b16 %v885
        %v962 = vunpack.c.h.b16 %v885
        %v963 = vunpack.c.l.b16 %v886
        %v964 = vunpack.c.h.b16 %v886
        %v965 = vunpack.c.l.b16 %v887
        %v966 = vunpack.c.h.b16 %v887
        %v967 = vunpack.c.l.b16 %v888
        %v968 = vunpack.c.h.b16 %v888
        %v969 = vunpack.c.l.b16 %v889
        %v970 = vunpack.c.h.b16 %v889
        %v971 = vunpack.c.l.b16 %v890
        %v972 = vunpack.c.h.b16 %v890
        %v973 = vunpack.c.l.b16 %v891
        %v974 = vunpack.c.h.b16 %v891
        %v975 = vunpack.c.l.b16 %v892
        %v976 = vunpack.c.h.b16 %v892
        %v977 = vunpack.c.l.b16 %v893
        %v978 = vunpack.c.h.b16 %v893
        %v979 = vunpack.c.l.b16 %v894
        %v980 = vunpack.c.h.b16 %v894
        %v981 = vunpack.c.l.b16 %v895
        %v982 = vunpack.c.h.b16 %v895
        %v983 = vunpack.c.l.b16 %v896
        %v984 = vunpack.c.h.b16 %v896
        %v985 = vunpack.c.l.b16 %v897
        %v986 = vunpack.c.h.b16 %v897
        %v987 = vunpack.c.l.b16 %v898
        %v988 = vunpack.c.h.b16 %v898
        %v989 = vunpack.c.l.b16 %v899
        %v990 = vunpack.c.h.b16 %v899
        %v991 = vunpack.c.l.b16 %v900
        %v992 = vunpack.c.h.b16 %v900
        %v993 = vunpack.c.l.b16 %v901
        %v994 = vunpack.c.h.b16 %v901
        %v995 = vunpack.c.l.b16 %v902
        %v996 = vunpack.c.h.b16 %v902
        %v997 = vunpack.c.l.b16 %v903
        %v998 = vunpack.c.h.b16 %v903
        %v999 = vunpack.c.l.b16 %v904
        %v1000 = vunpack.c.h.b16 %v904
        %v1001 = vpack.c.b16 %v945, %v937
        %v1002 = vpack.c.b16 %v946, %v938
        %v1003 = vpack.c.b16 %v947, %v939
        %v1004 = vpack.c.b16 %v948, %v940
        %v1005 = vpack.c.b16 %v949, %v941
        %v1006 = vpack.c.b16 %v950, %v942
        %v1007 = vpack.c.b16 %v951, %v943
        %v1008 = vpack.c.b16 %v952, %v944
        %v1009 = vpack.c.b16 %v961, %v953
        %v1010 = vpack.c.b16 %v962, %v954
        %v1011 = vpack.c.b16 %v963, %v955
        %v1012 = vpack.c.b16 %v964, %v956
        %v1013 = vpack.c.b16 %v965, %v957
        %v1014 = vpack.c.b16 %v966, %v958
        %v1015 = vpack.c.b16 %v967, %v959
        %v1016 = vpack.c.b16 %v968, %v960
        %v1017 = vpack.c.b16 %v977, %v969
        %v1018 = vpack.c.b16 %v978, %v970
        %v1019 = vpack.c.b16 %v979, %v971
        %v1020 = vpack.c.b16 %v980, %v972
        %v1021 = vpack.c.b16 %v981, %v973
        %v1022 = vpack.c.b16 %v982, %v974
        %v1023 = vpack.c.b16 %v983, %v975
        %v1024 = vpack.c.b16 %v984, %v976
        %v1025 = vpack.c.b16 %v993, %v985
        %v1026 = vpack.c.b16 %v994, %v986
        %v1027 = vpack.c.b16 %v995, %v987
        %v1028 = vpack.c.b16 %v996, %v988
        %v1029 = vpack.c.b16 %v997, %v989
        %v1030 = vpack.c.b16 %v998, %v990
        %v1031 = vpack.c.b16 %v999, %v991
        %v1032 = vpack.c.b16 %v1000, %v992
        %1065 = vmatpush.bf16.xpose.msra.mxu0 0
        %1066 = vmatpush.bf16.xpose.msra.mxu0 0
        %1067 = vmatpush.bf16.xpose.msra.mxu0 0
        %1068 = vmatpush.bf16.xpose.msra.mxu0 0
        %1069 = vmatpush.bf16.xpose.msra.mxu0 %v1025
        %1070 = vmatpush.bf16.xpose.msra.mxu0 %v1017
        %1071 = vmatpush.bf16.xpose.msra.mxu0 %v1009
        %1072 = vmatpush.bf16.xpose.msra.mxu0 %v1001
        %1073 = vmatmul.bf16.gmra.mxu0 %v745
        %v1074 = vpop.f32.mrf.mxu0
        %v1075 = vadd.f32 0.0, %v1074
        %v1076 = vpop.f32.mrf.mxu0
        %v1077 = vadd.f32 0.0, %v1076
        %1078 = vmatmul.bf16.gmra.mxu0 %v753
        %v1079 = vpop.f32.mrf.mxu0
        %v1080 = vadd.f32 0.0, %v1079
        %v1081 = vpop.f32.mrf.mxu0
        %v1082 = vadd.f32 0.0, %v1081
        %1083 = vmatmul.bf16.gmra.mxu0 %v761
        %v1084 = vpop.f32.mrf.mxu0
        %v1085 = vadd.f32 0.0, %v1084
        %v1086 = vpop.f32.mrf.mxu0
        %v1087 = vadd.f32 0.0, %v1086
        %1088 = vmatmul.bf16.gmra.mxu0 %v769
        %v1089 = vpop.f32.mrf.mxu0
        %v1090 = vadd.f32 0.0, %v1089
        %v1091 = vpop.f32.mrf.mxu0
        %v1092 = vadd.f32 0.0, %v1091
        %1093 = vmatmul.bf16.gmra.mxu0 %v777
        %v1094 = vpop.f32.mrf.mxu0
        %v1095 = vadd.f32 0.0, %v1094
        %v1096 = vpop.f32.mrf.mxu0
        %v1097 = vadd.f32 0.0, %v1096
        %1098 = vmatmul.bf16.gmra.mxu0 %v785
        %v1099 = vpop.f32.mrf.mxu0
        %v1100 = vadd.f32 0.0, %v1099
        %v1101 = vpop.f32.mrf.mxu0
        %v1102 = vadd.f32 0.0, %v1101
        %1103 = vmatmul.bf16.gmra.mxu0 %v793
        %v1104 = vpop.f32.mrf.mxu0
        %v1105 = vadd.f32 0.0, %v1104
        %v1106 = vpop.f32.mrf.mxu0
        %v1107 = vadd.f32 0.0, %v1106
        %1108 = vmatmul.bf16.gmra.mxu0 %v801
        %v1109 = vpop.f32.mrf.mxu0
        %v1110 = vadd.f32 0.0, %v1109
        %v1111 = vpop.f32.mrf.mxu0
        %v1112 = vadd.f32 0.0, %v1111
        %1113 = vmatmul.bf16.gmra.mxu0 %v809
        %v1114 = vpop.f32.mrf.mxu0
        %v1115 = vadd.f32 0.0, %v1114
        %v1116 = vpop.f32.mrf.mxu0
        %v1117 = vadd.f32 0.0, %v1116
        %1118 = vmatmul.bf16.gmra.mxu0 %v817
        %v1119 = vpop.f32.mrf.mxu0
        %v1120 = vadd.f32 0.0, %v1119
        %v1121 = vpop.f32.mrf.mxu0
        %v1122 = vadd.f32 0.0, %v1121
        %1123 = vmatmul.bf16.gmra.mxu0 %v825
        %v1124 = vpop.f32.mrf.mxu0
        %v1125 = vadd.f32 0.0, %v1124
        %v1126 = vpop.f32.mrf.mxu0
        %v1127 = vadd.f32 0.0, %v1126
        %1128 = vmatmul.bf16.gmra.mxu0 %v833
        %v1129 = vpop.f32.mrf.mxu0
        %v1130 = vadd.f32 0.0, %v1129
        %v1131 = vpop.f32.mrf.mxu0
        %v1132 = vadd.f32 0.0, %v1131
        %1133 = vmatmul.bf16.gmra.mxu0 %v841
        %v1134 = vpop.f32.mrf.mxu0
        %v1135 = vadd.f32 0.0, %v1134
        %v1136 = vpop.f32.mrf.mxu0
        %v1137 = vadd.f32 0.0, %v1136
        %1138 = vmatmul.bf16.gmra.mxu0 %v849
        %v1139 = vpop.f32.mrf.mxu0
        %v1140 = vadd.f32 0.0, %v1139
        %v1141 = vpop.f32.mrf.mxu0
        %v1142 = vadd.f32 0.0, %v1141
        %1143 = vmatmul.bf16.gmra.mxu0 %v857
        %v1144 = vpop.f32.mrf.mxu0
        %v1145 = vadd.f32 0.0, %v1144
        %v1146 = vpop.f32.mrf.mxu0
        %v1147 = vadd.f32 0.0, %v1146
        %1148 = vmatmul.bf16.gmra.mxu0 %v865
        %v1149 = vpop.f32.mrf.mxu0
        %v1150 = vadd.f32 0.0, %v1149
        %v1151 = vpop.f32.mrf.mxu0
        %v1152 = vadd.f32 0.0, %v1151
        %1153 = vdwg.mxu0
        %1154 = vmatpush.bf16.xpose.msra.mxu0 0
        %1155 = vmatpush.bf16.xpose.msra.mxu0 0
        %1156 = vmatpush.bf16.xpose.msra.mxu0 0
        %1157 = vmatpush.bf16.xpose.msra.mxu0 0
        %1158 = vmatpush.bf16.xpose.msra.mxu0 %v1026
        %1159 = vmatpush.bf16.xpose.msra.mxu0 %v1018
        %1160 = vmatpush.bf16.xpose.msra.mxu0 %v1010
        %1161 = vmatpush.bf16.xpose.msra.mxu0 %v1002
        %1162 = vmatmul.bf16.gmra.mxu0 %v746
        %v1163 = vpop.f32.mrf.mxu0
        %v1164 = vadd.f32 %v1075, %v1163
        %v1165 = vpop.f32.mrf.mxu0
        %v1166 = vadd.f32 %v1077, %v1165
        %1167 = vmatmul.bf16.gmra.mxu0 %v754
        %v1168 = vpop.f32.mrf.mxu0
        %v1169 = vadd.f32 %v1080, %v1168
        %v1170 = vpop.f32.mrf.mxu0
        %v1171 = vadd.f32 %v1082, %v1170
        %1172 = vmatmul.bf16.gmra.mxu0 %v762
        %v1173 = vpop.f32.mrf.mxu0
        %v1174 = vadd.f32 %v1085, %v1173
        %v1175 = vpop.f32.mrf.mxu0
        %v1176 = vadd.f32 %v1087, %v1175
        %1177 = vmatmul.bf16.gmra.mxu0 %v770
        %v1178 = vpop.f32.mrf.mxu0
        %v1179 = vadd.f32 %v1090, %v1178
        %v1180 = vpop.f32.mrf.mxu0
        %v1181 = vadd.f32 %v1092, %v1180
        %1182 = vmatmul.bf16.gmra.mxu0 %v778
        %v1183 = vpop.f32.mrf.mxu0
        %v1184 = vadd.f32 %v1095, %v1183
        %v1185 = vpop.f32.mrf.mxu0
        %v1186 = vadd.f32 %v1097, %v1185
        %1187 = vmatmul.bf16.gmra.mxu0 %v786
        %v1188 = vpop.f32.mrf.mxu0
        %v1189 = vadd.f32 %v1100, %v1188
        %v1190 = vpop.f32.mrf.mxu0
        %v1191 = vadd.f32 %v1102, %v1190
        %1192 = vmatmul.bf16.gmra.mxu0 %v794
        %v1193 = vpop.f32.mrf.mxu0
        %v1194 = vadd.f32 %v1105, %v1193
        %v1195 = vpop.f32.mrf.mxu0
        %v1196 = vadd.f32 %v1107, %v1195
        %1197 = vmatmul.bf16.gmra.mxu0 %v802
        %v1198 = vpop.f32.mrf.mxu0
        %v1199 = vadd.f32 %v1110, %v1198
        %v1200 = vpop.f32.mrf.mxu0
        %v1201 = vadd.f32 %v1112, %v1200
        %1202 = vmatmul.bf16.gmra.mxu0 %v810
        %v1203 = vpop.f32.mrf.mxu0
        %v1204 = vadd.f32 %v1115, %v1203
        %v1205 = vpop.f32.mrf.mxu0
        %v1206 = vadd.f32 %v1117, %v1205
        %1207 = vmatmul.bf16.gmra.mxu0 %v818
        %v1208 = vpop.f32.mrf.mxu0
        %v1209 = vadd.f32 %v1120, %v1208
        %v1210 = vpop.f32.mrf.mxu0
        %v1211 = vadd.f32 %v1122, %v1210
        %1212 = vmatmul.bf16.gmra.mxu0 %v826
        %v1213 = vpop.f32.mrf.mxu0
        %v1214 = vadd.f32 %v1125, %v1213
        %v1215 = vpop.f32.mrf.mxu0
        %v1216 = vadd.f32 %v1127, %v1215
        %1217 = vmatmul.bf16.gmra.mxu0 %v834
        %v1218 = vpop.f32.mrf.mxu0
        %v1219 = vadd.f32 %v1130, %v1218
        %v1220 = vpop.f32.mrf.mxu0
        %v1221 = vadd.f32 %v1132, %v1220
        %1222 = vmatmul.bf16.gmra.mxu0 %v842
        %v1223 = vpop.f32.mrf.mxu0
        %v1224 = vadd.f32 %v1135, %v1223
        %v1225 = vpop.f32.mrf.mxu0
        %v1226 = vadd.f32 %v1137, %v1225
        %1227 = vmatmul.bf16.gmra.mxu0 %v850
        %v1228 = vpop.f32.mrf.mxu0
        %v1229 = vadd.f32 %v1140, %v1228
        %v1230 = vpop.f32.mrf.mxu0
        %v1231 = vadd.f32 %v1142, %v1230
        %1232 = vmatmul.bf16.gmra.mxu0 %v858
        %v1233 = vpop.f32.mrf.mxu0
        %v1234 = vadd.f32 %v1145, %v1233
        %v1235 = vpop.f32.mrf.mxu0
        %v1236 = vadd.f32 %v1147, %v1235
        %1237 = vmatmul.bf16.gmra.mxu0 %v866
        %v1238 = vpop.f32.mrf.mxu0
        %v1239 = vadd.f32 %v1150, %v1238
        %v1240 = vpop.f32.mrf.mxu0
        %v1241 = vadd.f32 %v1152, %v1240
        %1242 = vdwg.mxu0
        %1243 = vmatpush.bf16.xpose.msra.mxu0 0
        %1244 = vmatpush.bf16.xpose.msra.mxu0 0
        %1245 = vmatpush.bf16.xpose.msra.mxu0 0
        %1246 = vmatpush.bf16.xpose.msra.mxu0 0
        %1247 = vmatpush.bf16.xpose.msra.mxu0 %v1027
        %1248 = vmatpush.bf16.xpose.msra.mxu0 %v1019
        %1249 = vmatpush.bf16.xpose.msra.mxu0 %v1011
        %1250 = vmatpush.bf16.xpose.msra.mxu0 %v1003
        %1251 = vmatmul.bf16.gmra.mxu0 %v747
        %v1252 = vpop.f32.mrf.mxu0
        %v1253 = vadd.f32 %v1164, %v1252
        %v1254 = vpop.f32.mrf.mxu0
        %v1255 = vadd.f32 %v1166, %v1254
        %1256 = vmatmul.bf16.gmra.mxu0 %v755
        %v1257 = vpop.f32.mrf.mxu0
        %v1258 = vadd.f32 %v1169, %v1257
        %v1259 = vpop.f32.mrf.mxu0
        %v1260 = vadd.f32 %v1171, %v1259
        %1261 = vmatmul.bf16.gmra.mxu0 %v763
        %v1262 = vpop.f32.mrf.mxu0
        %v1263 = vadd.f32 %v1174, %v1262
        %v1264 = vpop.f32.mrf.mxu0
        %v1265 = vadd.f32 %v1176, %v1264
        %1266 = vmatmul.bf16.gmra.mxu0 %v771
        %v1267 = vpop.f32.mrf.mxu0
        %v1268 = vadd.f32 %v1179, %v1267
        %v1269 = vpop.f32.mrf.mxu0
        %v1270 = vadd.f32 %v1181, %v1269
        %1271 = vmatmul.bf16.gmra.mxu0 %v779
        %v1272 = vpop.f32.mrf.mxu0
        %v1273 = vadd.f32 %v1184, %v1272
        %v1274 = vpop.f32.mrf.mxu0
        %v1275 = vadd.f32 %v1186, %v1274
        %1276 = vmatmul.bf16.gmra.mxu0 %v787
        %v1277 = vpop.f32.mrf.mxu0
        %v1278 = vadd.f32 %v1189, %v1277
        %v1279 = vpop.f32.mrf.mxu0
        %v1280 = vadd.f32 %v1191, %v1279
        %1281 = vmatmul.bf16.gmra.mxu0 %v795
        %v1282 = vpop.f32.mrf.mxu0
        %v1283 = vadd.f32 %v1194, %v1282
        %v1284 = vpop.f32.mrf.mxu0
        %v1285 = vadd.f32 %v1196, %v1284
        %1286 = vmatmul.bf16.gmra.mxu0 %v803
        %v1287 = vpop.f32.mrf.mxu0
        %v1288 = vadd.f32 %v1199, %v1287
        %v1289 = vpop.f32.mrf.mxu0
        %v1290 = vadd.f32 %v1201, %v1289
        %1291 = vmatmul.bf16.gmra.mxu0 %v811
        %v1292 = vpop.f32.mrf.mxu0
        %v1293 = vadd.f32 %v1204, %v1292
        %v1294 = vpop.f32.mrf.mxu0
        %v1295 = vadd.f32 %v1206, %v1294
        %1296 = vmatmul.bf16.gmra.mxu0 %v819
        %v1297 = vpop.f32.mrf.mxu0
        %v1298 = vadd.f32 %v1209, %v1297
        %v1299 = vpop.f32.mrf.mxu0
        %v1300 = vadd.f32 %v1211, %v1299
        %1301 = vmatmul.bf16.gmra.mxu0 %v827
        %v1302 = vpop.f32.mrf.mxu0
        %v1303 = vadd.f32 %v1214, %v1302
        %v1304 = vpop.f32.mrf.mxu0
        %v1305 = vadd.f32 %v1216, %v1304
        %1306 = vmatmul.bf16.gmra.mxu0 %v835
        %v1307 = vpop.f32.mrf.mxu0
        %v1308 = vadd.f32 %v1219, %v1307
        %v1309 = vpop.f32.mrf.mxu0
        %v1310 = vadd.f32 %v1221, %v1309
        %1311 = vmatmul.bf16.gmra.mxu0 %v843
        %v1312 = vpop.f32.mrf.mxu0
        %v1313 = vadd.f32 %v1224, %v1312
        %v1314 = vpop.f32.mrf.mxu0
        %v1315 = vadd.f32 %v1226, %v1314
        %1316 = vmatmul.bf16.gmra.mxu0 %v851
        %v1317 = vpop.f32.mrf.mxu0
        %v1318 = vadd.f32 %v1229, %v1317
        %v1319 = vpop.f32.mrf.mxu0
        %v1320 = vadd.f32 %v1231, %v1319
        %1321 = vmatmul.bf16.gmra.mxu0 %v859
        %v1322 = vpop.f32.mrf.mxu0
        %v1323 = vadd.f32 %v1234, %v1322
        %v1324 = vpop.f32.mrf.mxu0
        %v1325 = vadd.f32 %v1236, %v1324
        %1326 = vmatmul.bf16.gmra.mxu0 %v867
        %v1327 = vpop.f32.mrf.mxu0
        %v1328 = vadd.f32 %v1239, %v1327
        %v1329 = vpop.f32.mrf.mxu0
        %v1330 = vadd.f32 %v1241, %v1329
        %1331 = vdwg.mxu0
        %1332 = vmatpush.bf16.xpose.msra.mxu0 0
        %1333 = vmatpush.bf16.xpose.msra.mxu0 0
        %1334 = vmatpush.bf16.xpose.msra.mxu0 0
        %1335 = vmatpush.bf16.xpose.msra.mxu0 0
        %1336 = vmatpush.bf16.xpose.msra.mxu0 %v1028
        %1337 = vmatpush.bf16.xpose.msra.mxu0 %v1020
        %1338 = vmatpush.bf16.xpose.msra.mxu0 %v1012
        %1339 = vmatpush.bf16.xpose.msra.mxu0 %v1004
        %1340 = vmatmul.bf16.gmra.mxu0 %v748
        %v1341 = vpop.f32.mrf.mxu0
        %v1342 = vadd.f32 %v1253, %v1341
        %v1343 = vpop.f32.mrf.mxu0
        %v1344 = vadd.f32 %v1255, %v1343
        %1345 = vmatmul.bf16.gmra.mxu0 %v756
        %v1346 = vpop.f32.mrf.mxu0
        %v1347 = vadd.f32 %v1258, %v1346
        %v1348 = vpop.f32.mrf.mxu0
        %v1349 = vadd.f32 %v1260, %v1348
        %1350 = vmatmul.bf16.gmra.mxu0 %v764
        %v1351 = vpop.f32.mrf.mxu0
        %v1352 = vadd.f32 %v1263, %v1351
        %v1353 = vpop.f32.mrf.mxu0
        %v1354 = vadd.f32 %v1265, %v1353
        %1355 = vmatmul.bf16.gmra.mxu0 %v772
        %v1356 = vpop.f32.mrf.mxu0
        %v1357 = vadd.f32 %v1268, %v1356
        %v1358 = vpop.f32.mrf.mxu0
        %v1359 = vadd.f32 %v1270, %v1358
        %1360 = vmatmul.bf16.gmra.mxu0 %v780
        %v1361 = vpop.f32.mrf.mxu0
        %v1362 = vadd.f32 %v1273, %v1361
        %v1363 = vpop.f32.mrf.mxu0
        %v1364 = vadd.f32 %v1275, %v1363
        %1365 = vmatmul.bf16.gmra.mxu0 %v788
        %v1366 = vpop.f32.mrf.mxu0
        %v1367 = vadd.f32 %v1278, %v1366
        %v1368 = vpop.f32.mrf.mxu0
        %v1369 = vadd.f32 %v1280, %v1368
        %1370 = vmatmul.bf16.gmra.mxu0 %v796
        %v1371 = vpop.f32.mrf.mxu0
        %v1372 = vadd.f32 %v1283, %v1371
        %v1373 = vpop.f32.mrf.mxu0
        %v1374 = vadd.f32 %v1285, %v1373
        %1375 = vmatmul.bf16.gmra.mxu0 %v804
        %v1376 = vpop.f32.mrf.mxu0
        %v1377 = vadd.f32 %v1288, %v1376
        %v1378 = vpop.f32.mrf.mxu0
        %v1379 = vadd.f32 %v1290, %v1378
        %1380 = vmatmul.bf16.gmra.mxu0 %v812
        %v1381 = vpop.f32.mrf.mxu0
        %v1382 = vadd.f32 %v1293, %v1381
        %v1383 = vpop.f32.mrf.mxu0
        %v1384 = vadd.f32 %v1295, %v1383
        %1385 = vmatmul.bf16.gmra.mxu0 %v820
        %v1386 = vpop.f32.mrf.mxu0
        %v1387 = vadd.f32 %v1298, %v1386
        %v1388 = vpop.f32.mrf.mxu0
        %v1389 = vadd.f32 %v1300, %v1388
        %1390 = vmatmul.bf16.gmra.mxu0 %v828
        %v1391 = vpop.f32.mrf.mxu0
        %v1392 = vadd.f32 %v1303, %v1391
        %v1393 = vpop.f32.mrf.mxu0
        %v1394 = vadd.f32 %v1305, %v1393
        %1395 = vmatmul.bf16.gmra.mxu0 %v836
        %v1396 = vpop.f32.mrf.mxu0
        %v1397 = vadd.f32 %v1308, %v1396
        %v1398 = vpop.f32.mrf.mxu0
        %v1399 = vadd.f32 %v1310, %v1398
        %1400 = vmatmul.bf16.gmra.mxu0 %v844
        %v1401 = vpop.f32.mrf.mxu0
        %v1402 = vadd.f32 %v1313, %v1401
        %v1403 = vpop.f32.mrf.mxu0
        %v1404 = vadd.f32 %v1315, %v1403
        %1405 = vmatmul.bf16.gmra.mxu0 %v852
        %v1406 = vpop.f32.mrf.mxu0
        %v1407 = vadd.f32 %v1318, %v1406
        %v1408 = vpop.f32.mrf.mxu0
        %v1409 = vadd.f32 %v1320, %v1408
        %1410 = vmatmul.bf16.gmra.mxu0 %v860
        %v1411 = vpop.f32.mrf.mxu0
        %v1412 = vadd.f32 %v1323, %v1411
        %v1413 = vpop.f32.mrf.mxu0
        %v1414 = vadd.f32 %v1325, %v1413
        %1415 = vmatmul.bf16.gmra.mxu0 %v868
        %v1416 = vpop.f32.mrf.mxu0
        %v1417 = vadd.f32 %v1328, %v1416
        %v1418 = vpop.f32.mrf.mxu0
        %v1419 = vadd.f32 %v1330, %v1418
        %1420 = vdwg.mxu0
        %1421 = vmatpush.bf16.xpose.msra.mxu0 0
        %1422 = vmatpush.bf16.xpose.msra.mxu0 0
        %1423 = vmatpush.bf16.xpose.msra.mxu0 0
        %1424 = vmatpush.bf16.xpose.msra.mxu0 0
        %1425 = vmatpush.bf16.xpose.msra.mxu0 %v1029
        %1426 = vmatpush.bf16.xpose.msra.mxu0 %v1021
        %1427 = vmatpush.bf16.xpose.msra.mxu0 %v1013
        %1428 = vmatpush.bf16.xpose.msra.mxu0 %v1005
        %1429 = vmatmul.bf16.gmra.mxu0 %v749
        %v1430 = vpop.f32.mrf.mxu0
        %v1431 = vadd.f32 %v1342, %v1430
        %v1432 = vpop.f32.mrf.mxu0
        %v1433 = vadd.f32 %v1344, %v1432
        %1434 = vmatmul.bf16.gmra.mxu0 %v757
        %v1435 = vpop.f32.mrf.mxu0
        %v1436 = vadd.f32 %v1347, %v1435
        %v1437 = vpop.f32.mrf.mxu0
        %v1438 = vadd.f32 %v1349, %v1437
        %1439 = vmatmul.bf16.gmra.mxu0 %v765
        %v1440 = vpop.f32.mrf.mxu0
        %v1441 = vadd.f32 %v1352, %v1440
        %v1442 = vpop.f32.mrf.mxu0
        %v1443 = vadd.f32 %v1354, %v1442
        %1444 = vmatmul.bf16.gmra.mxu0 %v773
        %v1445 = vpop.f32.mrf.mxu0
        %v1446 = vadd.f32 %v1357, %v1445
        %v1447 = vpop.f32.mrf.mxu0
        %v1448 = vadd.f32 %v1359, %v1447
        %1449 = vmatmul.bf16.gmra.mxu0 %v781
        %v1450 = vpop.f32.mrf.mxu0
        %v1451 = vadd.f32 %v1362, %v1450
        %v1452 = vpop.f32.mrf.mxu0
        %v1453 = vadd.f32 %v1364, %v1452
        %1454 = vmatmul.bf16.gmra.mxu0 %v789
        %v1455 = vpop.f32.mrf.mxu0
        %v1456 = vadd.f32 %v1367, %v1455
        %v1457 = vpop.f32.mrf.mxu0
        %v1458 = vadd.f32 %v1369, %v1457
        %1459 = vmatmul.bf16.gmra.mxu0 %v797
        %v1460 = vpop.f32.mrf.mxu0
        %v1461 = vadd.f32 %v1372, %v1460
        %v1462 = vpop.f32.mrf.mxu0
        %v1463 = vadd.f32 %v1374, %v1462
        %1464 = vmatmul.bf16.gmra.mxu0 %v805
        %v1465 = vpop.f32.mrf.mxu0
        %v1466 = vadd.f32 %v1377, %v1465
        %v1467 = vpop.f32.mrf.mxu0
        %v1468 = vadd.f32 %v1379, %v1467
        %1469 = vmatmul.bf16.gmra.mxu0 %v813
        %v1470 = vpop.f32.mrf.mxu0
        %v1471 = vadd.f32 %v1382, %v1470
        %v1472 = vpop.f32.mrf.mxu0
        %v1473 = vadd.f32 %v1384, %v1472
        %1474 = vmatmul.bf16.gmra.mxu0 %v821
        %v1475 = vpop.f32.mrf.mxu0
        %v1476 = vadd.f32 %v1387, %v1475
        %v1477 = vpop.f32.mrf.mxu0
        %v1478 = vadd.f32 %v1389, %v1477
        %1479 = vmatmul.bf16.gmra.mxu0 %v829
        %v1480 = vpop.f32.mrf.mxu0
        %v1481 = vadd.f32 %v1392, %v1480
        %v1482 = vpop.f32.mrf.mxu0
        %v1483 = vadd.f32 %v1394, %v1482
        %1484 = vmatmul.bf16.gmra.mxu0 %v837
        %v1485 = vpop.f32.mrf.mxu0
        %v1486 = vadd.f32 %v1397, %v1485
        %v1487 = vpop.f32.mrf.mxu0
        %v1488 = vadd.f32 %v1399, %v1487
        %1489 = vmatmul.bf16.gmra.mxu0 %v845
        %v1490 = vpop.f32.mrf.mxu0
        %v1491 = vadd.f32 %v1402, %v1490
        %v1492 = vpop.f32.mrf.mxu0
        %v1493 = vadd.f32 %v1404, %v1492
        %1494 = vmatmul.bf16.gmra.mxu0 %v853
        %v1495 = vpop.f32.mrf.mxu0
        %v1496 = vadd.f32 %v1407, %v1495
        %v1497 = vpop.f32.mrf.mxu0
        %v1498 = vadd.f32 %v1409, %v1497
        %1499 = vmatmul.bf16.gmra.mxu0 %v861
        %v1500 = vpop.f32.mrf.mxu0
        %v1501 = vadd.f32 %v1412, %v1500
        %v1502 = vpop.f32.mrf.mxu0
        %v1503 = vadd.f32 %v1414, %v1502
        %1504 = vmatmul.bf16.gmra.mxu0 %v869
        %v1505 = vpop.f32.mrf.mxu0
        %v1506 = vadd.f32 %v1417, %v1505
        %v1507 = vpop.f32.mrf.mxu0
        %v1508 = vadd.f32 %v1419, %v1507
        %1509 = vdwg.mxu0
        %1510 = vmatpush.bf16.xpose.msra.mxu0 0
        %1511 = vmatpush.bf16.xpose.msra.mxu0 0
        %1512 = vmatpush.bf16.xpose.msra.mxu0 0
        %1513 = vmatpush.bf16.xpose.msra.mxu0 0
        %1514 = vmatpush.bf16.xpose.msra.mxu0 %v1030
        %1515 = vmatpush.bf16.xpose.msra.mxu0 %v1022
        %1516 = vmatpush.bf16.xpose.msra.mxu0 %v1014
        %1517 = vmatpush.bf16.xpose.msra.mxu0 %v1006
        %1518 = vmatmul.bf16.gmra.mxu0 %v750
        %v1519 = vpop.f32.mrf.mxu0
        %v1520 = vadd.f32 %v1431, %v1519
        %v1521 = vpop.f32.mrf.mxu0
        %v1522 = vadd.f32 %v1433, %v1521
        %1523 = vmatmul.bf16.gmra.mxu0 %v758
        %v1524 = vpop.f32.mrf.mxu0
        %v1525 = vadd.f32 %v1436, %v1524
        %v1526 = vpop.f32.mrf.mxu0
        %v1527 = vadd.f32 %v1438, %v1526
        %1528 = vmatmul.bf16.gmra.mxu0 %v766
        %v1529 = vpop.f32.mrf.mxu0
        %v1530 = vadd.f32 %v1441, %v1529
        %v1531 = vpop.f32.mrf.mxu0
        %v1532 = vadd.f32 %v1443, %v1531
        %1533 = vmatmul.bf16.gmra.mxu0 %v774
        %v1534 = vpop.f32.mrf.mxu0
        %v1535 = vadd.f32 %v1446, %v1534
        %v1536 = vpop.f32.mrf.mxu0
        %v1537 = vadd.f32 %v1448, %v1536
        %1538 = vmatmul.bf16.gmra.mxu0 %v782
        %v1539 = vpop.f32.mrf.mxu0
        %v1540 = vadd.f32 %v1451, %v1539
        %v1541 = vpop.f32.mrf.mxu0
        %v1542 = vadd.f32 %v1453, %v1541
        %1543 = vmatmul.bf16.gmra.mxu0 %v790
        %v1544 = vpop.f32.mrf.mxu0
        %v1545 = vadd.f32 %v1456, %v1544
        %v1546 = vpop.f32.mrf.mxu0
        %v1547 = vadd.f32 %v1458, %v1546
        %1548 = vmatmul.bf16.gmra.mxu0 %v798
        %v1549 = vpop.f32.mrf.mxu0
        %v1550 = vadd.f32 %v1461, %v1549
        %v1551 = vpop.f32.mrf.mxu0
        %v1552 = vadd.f32 %v1463, %v1551
        %1553 = vmatmul.bf16.gmra.mxu0 %v806
        %v1554 = vpop.f32.mrf.mxu0
        %v1555 = vadd.f32 %v1466, %v1554
        %v1556 = vpop.f32.mrf.mxu0
        %v1557 = vadd.f32 %v1468, %v1556
        %1558 = vmatmul.bf16.gmra.mxu0 %v814
        %v1559 = vpop.f32.mrf.mxu0
        %v1560 = vadd.f32 %v1471, %v1559
        %v1561 = vpop.f32.mrf.mxu0
        %v1562 = vadd.f32 %v1473, %v1561
        %1563 = vmatmul.bf16.gmra.mxu0 %v822
        %v1564 = vpop.f32.mrf.mxu0
        %v1565 = vadd.f32 %v1476, %v1564
        %v1566 = vpop.f32.mrf.mxu0
        %v1567 = vadd.f32 %v1478, %v1566
        %1568 = vmatmul.bf16.gmra.mxu0 %v830
        %v1569 = vpop.f32.mrf.mxu0
        %v1570 = vadd.f32 %v1481, %v1569
        %v1571 = vpop.f32.mrf.mxu0
        %v1572 = vadd.f32 %v1483, %v1571
        %1573 = vmatmul.bf16.gmra.mxu0 %v838
        %v1574 = vpop.f32.mrf.mxu0
        %v1575 = vadd.f32 %v1486, %v1574
        %v1576 = vpop.f32.mrf.mxu0
        %v1577 = vadd.f32 %v1488, %v1576
        %1578 = vmatmul.bf16.gmra.mxu0 %v846
        %v1579 = vpop.f32.mrf.mxu0
        %v1580 = vadd.f32 %v1491, %v1579
        %v1581 = vpop.f32.mrf.mxu0
        %v1582 = vadd.f32 %v1493, %v1581
        %1583 = vmatmul.bf16.gmra.mxu0 %v854
        %v1584 = vpop.f32.mrf.mxu0
        %v1585 = vadd.f32 %v1496, %v1584
        %v1586 = vpop.f32.mrf.mxu0
        %v1587 = vadd.f32 %v1498, %v1586
        %1588 = vmatmul.bf16.gmra.mxu0 %v862
        %v1589 = vpop.f32.mrf.mxu0
        %v1590 = vadd.f32 %v1501, %v1589
        %v1591 = vpop.f32.mrf.mxu0
        %v1592 = vadd.f32 %v1503, %v1591
        %1593 = vmatmul.bf16.gmra.mxu0 %v870
        %v1594 = vpop.f32.mrf.mxu0
        %v1595 = vadd.f32 %v1506, %v1594
        %v1596 = vpop.f32.mrf.mxu0
        %v1597 = vadd.f32 %v1508, %v1596
        %1598 = vdwg.mxu0
        %1599 = vmatpush.bf16.xpose.msra.mxu0 0
        %1600 = vmatpush.bf16.xpose.msra.mxu0 0
        %1601 = vmatpush.bf16.xpose.msra.mxu0 0
        %1602 = vmatpush.bf16.xpose.msra.mxu0 0
        %1603 = vmatpush.bf16.xpose.msra.mxu0 %v1031
        %1604 = vmatpush.bf16.xpose.msra.mxu0 %v1023
        %1605 = vmatpush.bf16.xpose.msra.mxu0 %v1015
        %1606 = vmatpush.bf16.xpose.msra.mxu0 %v1007
        %1607 = vmatmul.bf16.gmra.mxu0 %v751
        %v1608 = vpop.f32.mrf.mxu0
        %v1609 = vadd.f32 %v1520, %v1608
        %v1610 = vpop.f32.mrf.mxu0
        %v1611 = vadd.f32 %v1522, %v1610
        %1612 = vmatmul.bf16.gmra.mxu0 %v759
        %v1613 = vpop.f32.mrf.mxu0
        %v1614 = vadd.f32 %v1525, %v1613
        %v1615 = vpop.f32.mrf.mxu0
        %v1616 = vadd.f32 %v1527, %v1615
        %1617 = vmatmul.bf16.gmra.mxu0 %v767
        %v1618 = vpop.f32.mrf.mxu0
        %v1619 = vadd.f32 %v1530, %v1618
        %v1620 = vpop.f32.mrf.mxu0
        %v1621 = vadd.f32 %v1532, %v1620
        %1622 = vmatmul.bf16.gmra.mxu0 %v775
        %v1623 = vpop.f32.mrf.mxu0
        %v1624 = vadd.f32 %v1535, %v1623
        %v1625 = vpop.f32.mrf.mxu0
        %v1626 = vadd.f32 %v1537, %v1625
        %1627 = vmatmul.bf16.gmra.mxu0 %v783
        %v1628 = vpop.f32.mrf.mxu0
        %v1629 = vadd.f32 %v1540, %v1628
        %v1630 = vpop.f32.mrf.mxu0
        %v1631 = vadd.f32 %v1542, %v1630
        %1632 = vmatmul.bf16.gmra.mxu0 %v791
        %v1633 = vpop.f32.mrf.mxu0
        %v1634 = vadd.f32 %v1545, %v1633
        %v1635 = vpop.f32.mrf.mxu0
        %v1636 = vadd.f32 %v1547, %v1635
        %1637 = vmatmul.bf16.gmra.mxu0 %v799
        %v1638 = vpop.f32.mrf.mxu0
        %v1639 = vadd.f32 %v1550, %v1638
        %v1640 = vpop.f32.mrf.mxu0
        %v1641 = vadd.f32 %v1552, %v1640
        %1642 = vmatmul.bf16.gmra.mxu0 %v807
        %v1643 = vpop.f32.mrf.mxu0
        %v1644 = vadd.f32 %v1555, %v1643
        %v1645 = vpop.f32.mrf.mxu0
        %v1646 = vadd.f32 %v1557, %v1645
        %1647 = vmatmul.bf16.gmra.mxu0 %v815
        %v1648 = vpop.f32.mrf.mxu0
        %v1649 = vadd.f32 %v1560, %v1648
        %v1650 = vpop.f32.mrf.mxu0
        %v1651 = vadd.f32 %v1562, %v1650
        %1652 = vmatmul.bf16.gmra.mxu0 %v823
        %v1653 = vpop.f32.mrf.mxu0
        %v1654 = vadd.f32 %v1565, %v1653
        %v1655 = vpop.f32.mrf.mxu0
        %v1656 = vadd.f32 %v1567, %v1655
        %1657 = vmatmul.bf16.gmra.mxu0 %v831
        %v1658 = vpop.f32.mrf.mxu0
        %v1659 = vadd.f32 %v1570, %v1658
        %v1660 = vpop.f32.mrf.mxu0
        %v1661 = vadd.f32 %v1572, %v1660
        %1662 = vmatmul.bf16.gmra.mxu0 %v839
        %v1663 = vpop.f32.mrf.mxu0
        %v1664 = vadd.f32 %v1575, %v1663
        %v1665 = vpop.f32.mrf.mxu0
        %v1666 = vadd.f32 %v1577, %v1665
        %1667 = vmatmul.bf16.gmra.mxu0 %v847
        %v1668 = vpop.f32.mrf.mxu0
        %v1669 = vadd.f32 %v1580, %v1668
        %v1670 = vpop.f32.mrf.mxu0
        %v1671 = vadd.f32 %v1582, %v1670
        %1672 = vmatmul.bf16.gmra.mxu0 %v855
        %v1673 = vpop.f32.mrf.mxu0
        %v1674 = vadd.f32 %v1585, %v1673
        %v1675 = vpop.f32.mrf.mxu0
        %v1676 = vadd.f32 %v1587, %v1675
        %1677 = vmatmul.bf16.gmra.mxu0 %v863
        %v1678 = vpop.f32.mrf.mxu0
        %v1679 = vadd.f32 %v1590, %v1678
        %v1680 = vpop.f32.mrf.mxu0
        %v1681 = vadd.f32 %v1592, %v1680
        %1682 = vmatmul.bf16.gmra.mxu0 %v871
        %v1683 = vpop.f32.mrf.mxu0
        %v1684 = vadd.f32 %v1595, %v1683
        %v1685 = vpop.f32.mrf.mxu0
        %v1686 = vadd.f32 %v1597, %v1685
        %1687 = vdwg.mxu0
        %1688 = vmatpush.bf16.xpose.msra.mxu0 0
        %1689 = vmatpush.bf16.xpose.msra.mxu0 0
        %1690 = vmatpush.bf16.xpose.msra.mxu0 0
        %1691 = vmatpush.bf16.xpose.msra.mxu0 0
        %1692 = vmatpush.bf16.xpose.msra.mxu0 %v1032
        %1693 = vmatpush.bf16.xpose.msra.mxu0 %v1024
        %1694 = vmatpush.bf16.xpose.msra.mxu0 %v1016
        %1695 = vmatpush.bf16.xpose.msra.mxu0 %v1008
        %1696 = vmatmul.bf16.gmra.mxu0 %v752
        %v1697 = vpop.f32.mrf.mxu0
        %v1698 = vadd.f32 %v1609, %v1697
        %v1699 = vpop.f32.mrf.mxu0
        %v1700 = vadd.f32 %v1611, %v1699
        %1701 = vmatmul.bf16.gmra.mxu0 %v760
        %v1702 = vpop.f32.mrf.mxu0
        %v1703 = vadd.f32 %v1614, %v1702
        %v1704 = vpop.f32.mrf.mxu0
        %v1705 = vadd.f32 %v1616, %v1704
        %1706 = vmatmul.bf16.gmra.mxu0 %v768
        %v1707 = vpop.f32.mrf.mxu0
        %v1708 = vadd.f32 %v1619, %v1707
        %v1709 = vpop.f32.mrf.mxu0
        %v1710 = vadd.f32 %v1621, %v1709
        %1711 = vmatmul.bf16.gmra.mxu0 %v776
        %v1712 = vpop.f32.mrf.mxu0
        %v1713 = vadd.f32 %v1624, %v1712
        %v1714 = vpop.f32.mrf.mxu0
        %v1715 = vadd.f32 %v1626, %v1714
        %1716 = vmatmul.bf16.gmra.mxu0 %v784
        %v1717 = vpop.f32.mrf.mxu0
        %v1718 = vadd.f32 %v1629, %v1717
        %v1719 = vpop.f32.mrf.mxu0
        %v1720 = vadd.f32 %v1631, %v1719
        %1721 = vmatmul.bf16.gmra.mxu0 %v792
        %v1722 = vpop.f32.mrf.mxu0
        %v1723 = vadd.f32 %v1634, %v1722
        %v1724 = vpop.f32.mrf.mxu0
        %v1725 = vadd.f32 %v1636, %v1724
        %1726 = vmatmul.bf16.gmra.mxu0 %v800
        %v1727 = vpop.f32.mrf.mxu0
        %v1728 = vadd.f32 %v1639, %v1727
        %v1729 = vpop.f32.mrf.mxu0
        %v1730 = vadd.f32 %v1641, %v1729
        %1731 = vmatmul.bf16.gmra.mxu0 %v808
        %v1732 = vpop.f32.mrf.mxu0
        %v1733 = vadd.f32 %v1644, %v1732
        %v1734 = vpop.f32.mrf.mxu0
        %v1735 = vadd.f32 %v1646, %v1734
        %1736 = vmatmul.bf16.gmra.mxu0 %v816
        %v1737 = vpop.f32.mrf.mxu0
        %v1738 = vadd.f32 %v1649, %v1737
        %v1739 = vpop.f32.mrf.mxu0
        %v1740 = vadd.f32 %v1651, %v1739
        %1741 = vmatmul.bf16.gmra.mxu0 %v824
        %v1742 = vpop.f32.mrf.mxu0
        %v1743 = vadd.f32 %v1654, %v1742
        %v1744 = vpop.f32.mrf.mxu0
        %v1745 = vadd.f32 %v1656, %v1744
        %1746 = vmatmul.bf16.gmra.mxu0 %v832
        %v1747 = vpop.f32.mrf.mxu0
        %v1748 = vadd.f32 %v1659, %v1747
        %v1749 = vpop.f32.mrf.mxu0
        %v1750 = vadd.f32 %v1661, %v1749
        %1751 = vmatmul.bf16.gmra.mxu0 %v840
        %v1752 = vpop.f32.mrf.mxu0
        %v1753 = vadd.f32 %v1664, %v1752
        %v1754 = vpop.f32.mrf.mxu0
        %v1755 = vadd.f32 %v1666, %v1754
        %1756 = vmatmul.bf16.gmra.mxu0 %v848
        %v1757 = vpop.f32.mrf.mxu0
        %v1758 = vadd.f32 %v1669, %v1757
        %v1759 = vpop.f32.mrf.mxu0
        %v1760 = vadd.f32 %v1671, %v1759
        %1761 = vmatmul.bf16.gmra.mxu0 %v856
        %v1762 = vpop.f32.mrf.mxu0
        %v1763 = vadd.f32 %v1674, %v1762
        %v1764 = vpop.f32.mrf.mxu0
        %v1765 = vadd.f32 %v1676, %v1764
        %1766 = vmatmul.bf16.gmra.mxu0 %v864
        %v1767 = vpop.f32.mrf.mxu0
        %v1768 = vadd.f32 %v1679, %v1767
        %v1769 = vpop.f32.mrf.mxu0
        %v1770 = vadd.f32 %v1681, %v1769
        %1771 = vmatmul.bf16.gmra.mxu0 %v872
        %v1772 = vpop.f32.mrf.mxu0
        %v1773 = vadd.f32 %v1684, %v1772
        %v1774 = vpop.f32.mrf.mxu0
        %v1775 = vadd.f32 %v1686, %v1774
        %1776 = vdwg.mxu0
        %v1777 = vld [vmem:[#allocation2] sm:$0xff]
        %v1778 = vld [vmem:[#allocation2 + $0x8] sm:$0xff]
        %v1779 = vld [vmem:[#allocation2 + $0x10] sm:$0xff]
        %v1780 = vld [vmem:[#allocation2 + $0x18] sm:$0xff]
        %v1781 = vld [vmem:[#allocation2 + $0x20] sm:$0xff]
        %v1782 = vld [vmem:[#allocation2 + $0x28] sm:$0xff]
        %v1783 = vld [vmem:[#allocation2 + $0x30] sm:$0xff]
        %v1784 = vld [vmem:[#allocation2 + $0x38] sm:$0xff]
        %v1785 = vld [vmem:[%s391] sm:$0xff]
        %v1786 = vld [vmem:[%s391 + $0x8] sm:$0xff]
        %v1787 = vld [vmem:[%s391 + $0x10] sm:$0xff]
        %v1788 = vld [vmem:[%s391 + $0x18] sm:$0xff]
        %v1789 = vld [vmem:[%s391 + $0x20] sm:$0xff]
        %v1790 = vld [vmem:[%s391 + $0x28] sm:$0xff]
        %v1791 = vld [vmem:[%s391 + $0x30] sm:$0xff]
        %v1792 = vld [vmem:[%s391 + $0x38] sm:$0xff]
        %v1793 = vpack.c.bf16 %v1700, %v1698
        %v1794 = vpack.c.bf16 %v1705, %v1703
        %v1795 = vpack.c.bf16 %v1710, %v1708
        %v1796 = vpack.c.bf16 %v1715, %v1713
        %v1797 = vpack.c.bf16 %v1720, %v1718
        %v1798 = vpack.c.bf16 %v1725, %v1723
        %v1799 = vpack.c.bf16 %v1730, %v1728
        %v1800 = vpack.c.bf16 %v1735, %v1733
        %v1801 = vpack.c.bf16 %v1740, %v1738
        %v1802 = vpack.c.bf16 %v1745, %v1743
        %v1803 = vpack.c.bf16 %v1750, %v1748
        %v1804 = vpack.c.bf16 %v1755, %v1753
        %v1805 = vpack.c.bf16 %v1760, %v1758
        %v1806 = vpack.c.bf16 %v1765, %v1763
        %v1807 = vpack.c.bf16 %v1770, %v1768
        %v1808 = vpack.c.bf16 %v1775, %v1773
        %v1817 = vunpack.c.l.b16 %v1785
        %v1818 = vunpack.c.h.b16 %v1785
        %v1819 = vunpack.c.l.b16 %v1786
        %v1820 = vunpack.c.h.b16 %v1786
        %v1821 = vunpack.c.l.b16 %v1787
        %v1822 = vunpack.c.h.b16 %v1787
        %v1823 = vunpack.c.l.b16 %v1788
        %v1824 = vunpack.c.h.b16 %v1788
        %v1825 = vunpack.c.l.b16 %v1789
        %v1826 = vunpack.c.h.b16 %v1789
        %v1827 = vunpack.c.l.b16 %v1790
        %v1828 = vunpack.c.h.b16 %v1790
        %v1829 = vunpack.c.l.b16 %v1791
        %v1830 = vunpack.c.h.b16 %v1791
        %v1831 = vunpack.c.l.b16 %v1792
        %v1832 = vunpack.c.h.b16 %v1792
        %v1833 = vpack.c.b16 %v1819, %v1817
        %v1834 = vpack.c.b16 %v1820, %v1818
        %v1835 = vpack.c.b16 %v1823, %v1821
        %v1836 = vpack.c.b16 %v1824, %v1822
        %v1837 = vpack.c.b16 %v1827, %v1825
        %v1838 = vpack.c.b16 %v1828, %v1826
        %v1839 = vpack.c.b16 %v1831, %v1829
        %v1840 = vpack.c.b16 %v1832, %v1830
        %1849 = vmatpush.bf16.msra.mxu0 %v1800
        %1850 = vmatpush.bf16.msra.mxu0 %v1799
        %1851 = vmatpush.bf16.msra.mxu0 %v1798
        %1852 = vmatpush.bf16.msra.mxu0 %v1797
        %1853 = vmatpush.bf16.msra.mxu0 %v1796
        %1854 = vmatpush.bf16.msra.mxu0 %v1795
        %1855 = vmatpush.bf16.msra.mxu0 %v1794
        %1856 = vmatpush.bf16.msra.mxu0 %v1793
        %1857 = vmatmul.bf16.gmra.mxu0 %v1833
        %v1858 = vpop.f32.mrf.mxu0
        %v1859 = vadd.f32 0.0, %v1858
        %v1860 = vpop.f32.mrf.mxu0
        %v1861 = vadd.f32 0.0, %v1860
        %1862 = vmatmul.bf16.gmra.mxu0 %v1835
        %v1863 = vpop.f32.mrf.mxu0
        %v1864 = vadd.f32 0.0, %v1863
        %v1865 = vpop.f32.mrf.mxu0
        %v1866 = vadd.f32 0.0, %v1865
        %1867 = vmatmul.bf16.gmra.mxu0 %v1837
        %v1868 = vpop.f32.mrf.mxu0
        %v1869 = vadd.f32 0.0, %v1868
        %v1870 = vpop.f32.mrf.mxu0
        %v1871 = vadd.f32 0.0, %v1870
        %1872 = vmatmul.bf16.gmra.mxu0 %v1839
        %v1873 = vpop.f32.mrf.mxu0
        %v1874 = vadd.f32 0.0, %v1873
        %v1875 = vpop.f32.mrf.mxu0
        %v1876 = vadd.f32 0.0, %v1875
        %1877 = vdwg.mxu0
        %1878 = vmatpush.bf16.msra.mxu0 %v1808
        %1879 = vmatpush.bf16.msra.mxu0 %v1807
        %1880 = vmatpush.bf16.msra.mxu0 %v1806
        %1881 = vmatpush.bf16.msra.mxu0 %v1805
        %1882 = vmatpush.bf16.msra.mxu0 %v1804
        %1883 = vmatpush.bf16.msra.mxu0 %v1803
        %1884 = vmatpush.bf16.msra.mxu0 %v1802
        %1885 = vmatpush.bf16.msra.mxu0 %v1801
        %1886 = vmatmul.bf16.gmra.mxu0 %v1834
        %v1887 = vpop.f32.mrf.mxu0
        %v1888 = vadd.f32 %v1859, %v1887
        %v1889 = vpop.f32.mrf.mxu0
        %v1890 = vadd.f32 %v1861, %v1889
        %1891 = vmatmul.bf16.gmra.mxu0 %v1836
        %v1892 = vpop.f32.mrf.mxu0
        %v1893 = vadd.f32 %v1864, %v1892
        %v1894 = vpop.f32.mrf.mxu0
        %v1895 = vadd.f32 %v1866, %v1894
        %1896 = vmatmul.bf16.gmra.mxu0 %v1838
        %v1897 = vpop.f32.mrf.mxu0
        %v1898 = vadd.f32 %v1869, %v1897
        %v1899 = vpop.f32.mrf.mxu0
        %v1900 = vadd.f32 %v1871, %v1899
        %1901 = vmatmul.bf16.gmra.mxu0 %v1840
        %v1902 = vpop.f32.mrf.mxu0
        %v1903 = vadd.f32 %v1874, %v1902
        %v1904 = vpop.f32.mrf.mxu0
        %v1905 = vadd.f32 %v1876, %v1904
        %1906 = vdwg.mxu0
        %v1907 = vadd.f32 %v1777, %v1888
        %v1908 = vadd.f32 %v1778, %v1890
        %v1909 = vadd.f32 %v1779, %v1893
        %v1910 = vadd.f32 %v1780, %v1895
        %v1911 = vadd.f32 %v1781, %v1898
        %v1912 = vadd.f32 %v1782, %v1900
        %v1913 = vadd.f32 %v1783, %v1903
        %v1914 = vadd.f32 %v1784, %v1905
        %vm1915 = vcmask 523264
        %1916 = vst.msk [vmem:[#allocation2] sm:$0xff] %vm1915, %v1907
        %1917 = vst.msk [vmem:[#allocation2 + $0x8] sm:$0xff] %vm1915, %v1908
        %1918 = vst.msk [vmem:[#allocation2 + $0x10] sm:$0xff] %vm1915, %v1909
        %1919 = vst.msk [vmem:[#allocation2 + $0x18] sm:$0xff] %vm1915, %v1910
        %1920 = vst.msk [vmem:[#allocation2 + $0x20] sm:$0xff] %vm1915, %v1911
        %1921 = vst.msk [vmem:[#allocation2 + $0x28] sm:$0xff] %vm1915, %v1912
        %1922 = vst.msk [vmem:[#allocation2 + $0x30] sm:$0xff] %vm1915, %v1913
        %1923 = vst.msk [vmem:[#allocation2 + $0x38] sm:$0xff] %vm1915, %v1914
        %p1924 = scmp.eq.s32.totalorder %s39, 3
        // Predicated region
        $region61: #{tpu_custom_call.1} parent=39 // pred_check
          %p1925 = pneg %p1924
        $region62: #{tpu_custom_call.1} parent=39 // pred_check_branch
          %1927 = sbr.rel (%p1925) target = $region64
        $region63: #{tpu_custom_call.1} parent=39 // pred_region
          %v1928 = vld [vmem:[#allocation2] sm:$0xff]
          %v1929 = vld [vmem:[#allocation2 + $0x8] sm:$0xff]
          %v1930 = vld [vmem:[#allocation2 + $0x10] sm:$0xff]
          %v1931 = vld [vmem:[#allocation2 + $0x18] sm:$0xff]
          %v1932 = vld [vmem:[#allocation2 + $0x20] sm:$0xff]
          %v1933 = vld [vmem:[#allocation2 + $0x28] sm:$0xff]
          %v1934 = vld [vmem:[#allocation2 + $0x30] sm:$0xff]
          %v1935 = vld [vmem:[#allocation2 + $0x38] sm:$0xff]
          %v1936 = vld [vmem:[%s411] sm:$0xff]
          %v1937 = vld [vmem:[%s411 + $0x8] sm:$0xff]
          %v1938 = vld [vmem:[%s411 + $0x10] sm:$0xff]
          %v1939 = vld [vmem:[%s411 + $0x18] sm:$0xff]
          %v1940 = vld [vmem:[%s411 + $0x20] sm:$0xff]
          %v1941 = vld [vmem:[%s411 + $0x28] sm:$0xff]
          %v1942 = vld [vmem:[%s411 + $0x30] sm:$0xff]
          %v1943 = vld [vmem:[%s411 + $0x38] sm:$0xff]
          %v1944 = vsub.f32 %v1928, %v1936
          %v1945 = vsub.f32 %v1929, %v1937
          %v1946 = vsub.f32 %v1930, %v1938
          %v1947 = vsub.f32 %v1931, %v1939
          %v1948 = vsub.f32 %v1932, %v1940
          %v1949 = vsub.f32 %v1933, %v1941
          %v1950 = vsub.f32 %v1934, %v1942
          %v1951 = vsub.f32 %v1935, %v1943
          %v1952 = vmul.f32 %v1944, %v1944
          %v1953 = vmul.f32 %v1945, %v1945
          %v1954 = vmul.f32 %v1946, %v1946
          %v1955 = vmul.f32 %v1947, %v1947
          %v1956 = vmul.f32 %v1948, %v1948
          %v1957 = vmul.f32 %v1949, %v1949
          %v1958 = vmul.f32 %v1950, %v1950
          %v1959 = vmul.f32 %v1951, %v1951
          %v1960 = vsel %vm1915, %v1952, 0.0
          %v1961 = vsel %vm1915, %v1953, 0.0
          %v1962 = vadd.f32 %v1960, %v1961
          %v1963 = vsel %vm1915, %v1954, 0.0
          %v1964 = vadd.f32 %v1962, %v1963
          %v1965 = vsel %vm1915, %v1955, 0.0
          %v1966 = vadd.f32 %v1964, %v1965
          %v1967 = vsel %vm1915, %v1956, 0.0
          %v1968 = vadd.f32 %v1966, %v1967
          %v1969 = vsel %vm1915, %v1957, 0.0
          %v1970 = vadd.f32 %v1968, %v1969
          %v1971 = vsel %vm1915, %v1958, 0.0
          %v1972 = vadd.f32 %v1970, %v1971
          %v1973 = vsel %vm1915, %v1959, 0.0
          %v1974 = vadd.f32 %v1972, %v1973
          %1975 = vadd.xlane.f32.xlu0 %v1974
          %v1976 = vpop.xlane.xlu0 %1975
          %v1977 = vrot.slane %v1976, 4
          %v1978 = vadd.f32 %v1976, %v1977
          %v1979 = vrot.slane %v1978, 2
          %v1980 = vadd.f32 %v1978, %v1979
          %v1981 = vrot.slane %v1980, 1
          %v1982 = vadd.f32 %v1980, %v1981
          %s1983 = vtos %v1982
          %v1984 = vstv %s1983
          %1985 = vst [vmem:[%s453] sm:$0xff] %v1984
          %v1986 = vand.u32 2147483647, %v1944
          %v1987 = vand.u32 2147483647, %v1945
          %v1988 = vand.u32 2147483647, %v1946
          %v1989 = vand.u32 2147483647, %v1947
          %v1990 = vand.u32 2147483647, %v1948
          %v1991 = vand.u32 2147483647, %v1949
          %v1992 = vand.u32 2147483647, %v1950
          %v1993 = vand.u32 2147483647, %v1951
          %v1994 = vsel %vm1915, %v1986, 0.0
          %v1995 = vsel %vm1915, %v1987, 0.0
          %v1996 = vadd.f32 %v1994, %v1995
          %v1997 = vsel %vm1915, %v1988, 0.0
          %v1998 = vadd.f32 %v1996, %v1997
          %v1999 = vsel %vm1915, %v1989, 0.0
          %v2000 = vadd.f32 %v1998, %v1999
          %v2001 = vsel %vm1915, %v1990, 0.0
          %v2002 = vadd.f32 %v2000, %v2001
          %v2003 = vsel %vm1915, %v1991, 0.0
          %v2004 = vadd.f32 %v2002, %v2003
          %v2005 = vsel %vm1915, %v1992, 0.0
          %v2006 = vadd.f32 %v2004, %v2005
          %v2007 = vsel %vm1915, %v1993, 0.0
          %v2008 = vadd.f32 %v2006, %v2007
          %2009 = vadd.xlane.f32.xlu0 %v2008
          %v2010 = vpop.xlane.xlu0 %2009
          %v2011 = vrot.slane %v2010, 4
          %v2012 = vadd.f32 %v2010, %v2011
          %v2013 = vrot.slane %v2012, 2
          %v2014 = vadd.f32 %v2012, %v2013
          %v2015 = vrot.slane %v2014, 1
          %v2016 = vadd.f32 %v2014, %v2015
          %s2017 = vtos %v2016
          %v2018 = vstv %s2017
          %2019 = vst [vmem:[%s460] sm:$0xff] %v2018
        $region64: #{tpu_custom_call.1} parent=39 // pred_fallthru
          _
        %p2020 = scmp.eq.s32.totalorder %s38, 0
        %p2021 = pnand %p1924, %p2020
        %p2022 = pneg %p2021
        // Predicated region
        $region65: #{tpu_custom_call.1} parent=39 // pred_check
          _
        $region66: #{tpu_custom_call.1} parent=39 // pred_check_branch
          %2024 = sbr.rel (%p2021) target = $region68
        $region67: #{tpu_custom_call.1} parent=39 // pred_region
          %v2025 = vld [vmem:[%s474] sm:$0xff]
          %v2026 = vld [vmem:[%s474 + $0x8] sm:$0xff]
          %v2027 = vld [vmem:[%s474 + $0x10] sm:$0xff]
          %v2028 = vld [vmem:[%s474 + $0x18] sm:$0xff]
          %v2029 = vld [vmem:[%s474 + $0x20] sm:$0xff]
          %v2030 = vld [vmem:[%s474 + $0x28] sm:$0xff]
          %v2031 = vld [vmem:[%s474 + $0x30] sm:$0xff]
          %v2032 = vld [vmem:[%s474 + $0x38] sm:$0xff]
          %v2033 = vld [vmem:[%s474 + $0x40] sm:$0x3]
          %v2034 = vld [vmem:[%s474 + $0x48] sm:$0x3]
          %v2035 = vld [vmem:[%s474 + $0x50] sm:$0x3]
          %v2036 = vld [vmem:[%s474 + $0x58] sm:$0x3]
          %2037 = vmatpush.xpose.msra.mxu0 0.0
          %2038 = vmatpush.xpose.msra.mxu0 0.0
          %2039 = vmatpush.xpose.msra.mxu0 0.0
          %2040 = vmatpush.xpose.msra.mxu0 0.0
          %2041 = vmatpush.xpose.msra.mxu0 0.0
          %2042 = vmatpush.xpose.msra.mxu0 0.0
          %2043 = vmatpush.xpose.msra.mxu0 0.0
          %2044 = vmatpush.xpose.msra.mxu0 0.0
          %2045 = vmatpush.xpose.msra.mxu0 0.0
          %2046 = vmatpush.xpose.msra.mxu0 0.0
          %2047 = vmatpush.xpose.msra.mxu0 0.0
          %2048 = vmatpush.xpose.msra.mxu0 0.0
          %2049 = vmatpush.xpose.msra.mxu0 0.0
          %2050 = vmatpush.xpose.msra.mxu0 %v2033
          %2051 = vmatpush.xpose.msra.mxu0 %v2029
          %2052 = vmatpush.xpose.msra.mxu0 %v2025
          %2053 = vmatmul.f32.gmra.mxu0 %v2025
          %v2054 = vpop.f32.mrf.mxu0
          %v2055 = vadd.f32 0.0, %v2054
          %2056 = vmatmul.f32.gmra.mxu0 %v2029
          %v2057 = vpop.f32.mrf.mxu0
          %v2058 = vadd.f32 0.0, %v2057
          %2059 = vmatmul.f32.gmra.mxu0 %v2033
          %v2060 = vpop.f32.mrf.mxu0
          %v2061 = vadd.f32 0.0, %v2060
          %2062 = vdwg.mxu0
          %2063 = vmatpush.xpose.msra.mxu0 0.0
          %2064 = vmatpush.xpose.msra.mxu0 0.0
          %2065 = vmatpush.xpose.msra.mxu0 0.0
          %2066 = vmatpush.xpose.msra.mxu0 0.0
          %2067 = vmatpush.xpose.msra.mxu0 0.0
          %2068 = vmatpush.xpose.msra.mxu0 0.0
          %2069 = vmatpush.xpose.msra.mxu0 0.0
          %2070 = vmatpush.xpose.msra.mxu0 0.0
          %2071 = vmatpush.xpose.msra.mxu0 0.0
          %2072 = vmatpush.xpose.msra.mxu0 0.0
          %2073 = vmatpush.xpose.msra.mxu0 0.0
          %2074 = vmatpush.xpose.msra.mxu0 0.0
          %2075 = vmatpush.xpose.msra.mxu0 0.0
          %2076 = vmatpush.xpose.msra.mxu0 %v2034
          %2077 = vmatpush.xpose.msra.mxu0 %v2030
          %2078 = vmatpush.xpose.msra.mxu0 %v2026
          %2079 = vmatmul.f32.gmra.mxu0 %v2026
          %v2080 = vpop.f32.mrf.mxu0
          %v2081 = vadd.f32 %v2055, %v2080
          %2082 = vmatmul.f32.gmra.mxu0 %v2030
          %v2083 = vpop.f32.mrf.mxu0
          %v2084 = vadd.f32 %v2058, %v2083
          %2085 = vmatmul.f32.gmra.mxu0 %v2034
          %v2086 = vpop.f32.mrf.mxu0
          %v2087 = vadd.f32 %v2061, %v2086
          %2088 = vdwg.mxu0
          %2089 = vmatpush.xpose.msra.mxu0 0.0
          %2090 = vmatpush.xpose.msra.mxu0 0.0
          %2091 = vmatpush.xpose.msra.mxu0 0.0
          %2092 = vmatpush.xpose.msra.mxu0 0.0
          %2093 = vmatpush.xpose.msra.mxu0 0.0
          %2094 = vmatpush.xpose.msra.mxu0 0.0
          %2095 = vmatpush.xpose.msra.mxu0 0.0
          %2096 = vmatpush.xpose.msra.mxu0 0.0
          %2097 = vmatpush.xpose.msra.mxu0 0.0
          %2098 = vmatpush.xpose.msra.mxu0 0.0
          %2099 = vmatpush.xpose.msra.mxu0 0.0
          %2100 = vmatpush.xpose.msra.mxu0 0.0
          %2101 = vmatpush.xpose.msra.mxu0 0.0
          %2102 = vmatpush.xpose.msra.mxu0 %v2035
          %2103 = vmatpush.xpose.msra.mxu0 %v2031
          %2104 = vmatpush.xpose.msra.mxu0 %v2027
          %2105 = vmatmul.f32.gmra.mxu0 %v2027
          %v2106 = vpop.f32.mrf.mxu0
          %v2107 = vadd.f32 %v2081, %v2106
          %2108 = vmatmul.f32.gmra.mxu0 %v2031
          %v2109 = vpop.f32.mrf.mxu0
          %v2110 = vadd.f32 %v2084, %v2109
          %2111 = vmatmul.f32.gmra.mxu0 %v2035
          %v2112 = vpop.f32.mrf.mxu0
          %v2113 = vadd.f32 %v2087, %v2112
          %2114 = vdwg.mxu0
          %2115 = vmatpush.xpose.msra.mxu0 0.0
          %2116 = vmatpush.xpose.msra.mxu0 0.0
          %2117 = vmatpush.xpose.msra.mxu0 0.0
          %2118 = vmatpush.xpose.msra.mxu0 0.0
          %2119 = vmatpush.xpose.msra.mxu0 0.0
          %2120 = vmatpush.xpose.msra.mxu0 0.0
          %2121 = vmatpush.xpose.msra.mxu0 0.0
          %2122 = vmatpush.xpose.msra.mxu0 0.0
          %2123 = vmatpush.xpose.msra.mxu0 0.0
          %2124 = vmatpush.xpose.msra.mxu0 0.0
          %2125 = vmatpush.xpose.msra.mxu0 0.0
          %2126 = vmatpush.xpose.msra.mxu0 0.0
          %2127 = vmatpush.xpose.msra.mxu0 0.0
          %2128 = vmatpush.xpose.msra.mxu0 %v2036
          %2129 = vmatpush.xpose.msra.mxu0 %v2032
          %2130 = vmatpush.xpose.msra.mxu0 %v2028
          %2131 = vmatmul.f32.gmra.mxu0 %v2028
          %v2132 = vpop.f32.mrf.mxu0
          %v2133 = vadd.f32 %v2107, %v2132
          %2134 = vmatmul.f32.gmra.mxu0 %v2032
          %v2135 = vpop.f32.mrf.mxu0
          %v2136 = vadd.f32 %v2110, %v2135
          %2137 = vmatmul.f32.gmra.mxu0 %v2036
          %v2138 = vpop.f32.mrf.mxu0
          %v2139 = vadd.f32 %v2113, %v2138
          %2140 = vdwg.mxu0
          %v2141 = vlaneseq
          %v2142 = vshrl.u32 %v2141, 7
          %v2143 = vadd.s32 %v2142, 8
          %v2144 = vadd.s32 %v2142, 16
          %v2145 = vlaneseq
          %v2146 = vand.u32 %v2145, 127
          %vm2147 = vcmp.eq.s32.totalorder %v2142, %v2146
          %vm2148 = vcmp.eq.s32.totalorder %v2143, %v2146
          %vm2149 = vcmp.eq.s32.totalorder %v2144, %v2146
          %v2150 = vsel %vm2147, %v2133, 0.0
          %v2151 = vsel %vm2148, %v2136, 0.0
          %v2152 = vsel %vm2149, %v2139, 0.0
          %vm2153 = vcmask 146432
          %v2154 = vsel %vm2153, %v2150, 0.0
          %2155 = vadd.xlane.f32.xlu0 %v2154
          %v2156 = vpop.xlane.xlu0 %2155
          %v2157 = vsel %vm2153, %v2151, 0.0
          %2158 = vadd.xlane.f32.xlu0 %v2157
          %v2159 = vpop.xlane.xlu0 %2158
          %vm2160 = vcmask 140288
          %v2161 = vsel %vm2160, %v2152, 0.0
          %2162 = vadd.xlane.f32.xlu0 %v2161
          %v2163 = vpop.xlane.xlu0 %2162
          %v2164 = vadd.f32 %v2154, %v2157
          %v2165 = vadd.f32 %v2164, %v2161
          %v2166 = vrot.slane %v2165, 4
          %v2167 = vadd.f32 %v2165, %v2166
          %v2168 = vrot.slane %v2167, 2
          %v2169 = vadd.f32 %v2167, %v2168
          %v2170 = vrot.slane %v2169, 1
          %v2171 = vadd.f32 %v2169, %v2170
          %v2172 = vadd.f32 %v2156, %v2171
          %v2173 = vadd.f32 %v2159, %v2171
          %v2174 = vadd.f32 %v2163, %v2171
          %v2175 = vmul.f32 %v2133, 2.0
          %v2176 = vmul.f32 %v2136, 2.0
          %v2177 = vmul.f32 %v2139, 2.0
          %v2178 = vsub.f32 %v2172, %v2175
          %v2179 = vsub.f32 %v2173, %v2176
          %v2180 = vsub.f32 %v2174, %v2177
          %v2181 = vmax.f32 %v2178, 0.0
          %v2182 = vmax.f32 %v2179, 0.0
          %v2183 = vmax.f32 %v2180, 0.0
          %v2184 = vadd.f32 %v2172, %v2175
          %v2185 = vadd.f32 %v2173, %v2176
          %v2186 = vadd.f32 %v2174, %v2177
          %v2187 = vmax.f32 %v2184, 0.0
          %v2188 = vmax.f32 %v2185, 0.0
          %v2189 = vmax.f32 %v2186, 0.0
          %v2190 = vadd.f32 %v2181, 1e-09
          %v2191 = vadd.f32 %v2182, 1e-09
          %v2192 = vadd.f32 %v2183, 1e-09
          %v2193 = vrsqrt.pop %v2190
          %v2194 = vmul.f32 %v2193, %v2190
          %v2195 = vmul.f32 %v2194, %v2193
          %v2196 = vmul.f32 0.5, %v2195
          %v2197 = vsub.f32 1.5, %v2196
          %v2198 = vmul.f32 %v2193, %v2197
          %v2199 = vmul.f32 %v2190, %v2198
          %vm2200 = vcmp.eq.f32.partialorder %v2190, inf
          %v2201 = vsel %vm2200, %v2190, %v2199
          %vm2202 = vcmp.eq.f32.partialorder %v2190, 0.0
          %v2203 = vand.u32 %v2190, 2147483648
          %v2204 = vsel %vm2202, %v2203, %v2201
          %v2205 = vrsqrt.pop %v2191
          %v2206 = vmul.f32 %v2205, %v2191
          %v2207 = vmul.f32 %v2206, %v2205
          %v2208 = vmul.f32 0.5, %v2207
          %v2209 = vsub.f32 1.5, %v2208
          %v2210 = vmul.f32 %v2205, %v2209
          %v2211 = vmul.f32 %v2191, %v2210
          %vm2212 = vcmp.eq.f32.partialorder %v2191, inf
          %v2213 = vsel %vm2212, %v2191, %v2211
          %vm2214 = vcmp.eq.f32.partialorder %v2191, 0.0
          %v2215 = vand.u32 %v2191, 2147483648
          %v2216 = vsel %vm2214, %v2215, %v2213
          %v2217 = vrsqrt.pop %v2192
          %v2218 = vmul.f32 %v2217, %v2192
          %v2219 = vmul.f32 %v2218, %v2217
          %v2220 = vmul.f32 0.5, %v2219
          %v2221 = vsub.f32 1.5, %v2220
          %v2222 = vmul.f32 %v2217, %v2221
          %v2223 = vmul.f32 %v2192, %v2222
          %vm2224 = vcmp.eq.f32.partialorder %v2192, inf
          %v2225 = vsel %vm2224, %v2192, %v2223
          %vm2226 = vcmp.eq.f32.partialorder %v2192, 0.0
          %v2227 = vand.u32 %v2192, 2147483648
          %v2228 = vsel %vm2226, %v2227, %v2225
          %v2229 = vadd.f32 %v2187, 1e-09
          %v2230 = vadd.f32 %v2188, 1e-09
          %v2231 = vadd.f32 %v2189, 1e-09
          %v2232 = vrsqrt.pop %v2229
          %v2233 = vmul.f32 %v2232, %v2229
          %v2234 = vmul.f32 %v2233, %v2232
          %v2235 = vmul.f32 0.5, %v2234
          %v2236 = vsub.f32 1.5, %v2235
          %v2237 = vmul.f32 %v2232, %v2236
          %v2238 = vmul.f32 %v2229, %v2237
          %vm2239 = vcmp.eq.f32.partialorder %v2229, inf
          %v2240 = vsel %vm2239, %v2229, %v2238
          %vm2241 = vcmp.eq.f32.partialorder %v2229, 0.0
          %v2242 = vand.u32 %v2229, 2147483648
          %v2243 = vsel %vm2241, %v2242, %v2240
          %v2244 = vrsqrt.pop %v2230
          %v2245 = vmul.f32 %v2244, %v2230
          %v2246 = vmul.f32 %v2245, %v2244
          %v2247 = vmul.f32 0.5, %v2246
          %v2248 = vsub.f32 1.5, %v2247
          %v2249 = vmul.f32 %v2244, %v2248
          %v2250 = vmul.f32 %v2230, %v2249
          %vm2251 = vcmp.eq.f32.partialorder %v2230, inf
          %v2252 = vsel %vm2251, %v2230, %v2250
          %vm2253 = vcmp.eq.f32.partialorder %v2230, 0.0
          %v2254 = vand.u32 %v2230, 2147483648
          %v2255 = vsel %vm2253, %v2254, %v2252
          %v2256 = vrsqrt.pop %v2231
          %v2257 = vmul.f32 %v2256, %v2231
          %v2258 = vmul.f32 %v2257, %v2256
          %v2259 = vmul.f32 0.5, %v2258
          %v2260 = vsub.f32 1.5, %v2259
          %v2261 = vmul.f32 %v2256, %v2260
          %v2262 = vmul.f32 %v2231, %v2261
          %vm2263 = vcmp.eq.f32.partialorder %v2231, inf
          %v2264 = vsel %vm2263, %v2231, %v2262
          %vm2265 = vcmp.eq.f32.partialorder %v2231, 0.0
          %v2266 = vand.u32 %v2231, 2147483648
          %v2267 = vsel %vm2265, %v2266, %v2264
          %v2268 = vrcp.pop %v2243
          %v2269 = vrcp.pop %v2255
          %v2270 = vrcp.pop %v2267
          %v2271 = vmul.f32 %v2204, %v2268
          %v2272 = vmul.f32 %v2216, %v2269
          %v2273 = vmul.f32 %v2228, %v2270
          %vm2274 = vcmp.gt.f32.partialorder %v2271, 2.4142137
          %vm2275 = vcmp.gt.f32.partialorder %v2272, 2.4142137
          %vm2276 = vcmp.gt.f32.partialorder %v2273, 2.4142137
          %vm2277 = vcmp.gt.f32.partialorder %v2271, 0.41421357
          %vm2278 = vcmp.gt.f32.partialorder %v2272, 0.41421357
          %vm2279 = vcmp.gt.f32.partialorder %v2273, 0.41421357
          %v2280 = vrcp.pop %v2271
          %v2281 = vrcp.pop %v2272
          %v2282 = vrcp.pop %v2273
          %v2283 = vsub.f32 0.0, %v2280
          %v2284 = vsub.f32 0.0, %v2281
          %v2285 = vsub.f32 0.0, %v2282
          %v2286 = vsub.f32 %v2271, 1.0
          %v2287 = vsub.f32 %v2272, 1.0
          %v2288 = vsub.f32 %v2273, 1.0
          %v2289 = vadd.f32 %v2271, 1.0
          %v2290 = vadd.f32 %v2272, 1.0
          %v2291 = vadd.f32 %v2273, 1.0
          %v2292 = vrcp.pop %v2289
          %v2293 = vrcp.pop %v2290
          %v2294 = vrcp.pop %v2291
          %v2295 = vmul.f32 %v2286, %v2292
          %v2296 = vmul.f32 %v2287, %v2293
          %v2297 = vmul.f32 %v2288, %v2294
          %v2298 = vsel %vm2277, %v2295, %v2271
          %v2299 = vsel %vm2278, %v2296, %v2272
          %v2300 = vsel %vm2279, %v2297, %v2273
          %v2301 = vsel %vm2274, %v2283, %v2298
          %v2302 = vsel %vm2275, %v2284, %v2299
          %v2303 = vsel %vm2276, %v2285, %v2300
          %v2304 = vsel %vm2277, 0.7853982, 0.0
          %v2305 = vsel %vm2278, 0.7853982, 0.0
          %v2306 = vsel %vm2279, 0.7853982, 0.0
          %v2307 = vsel %vm2274, 1.5707964, %v2304
          %v2308 = vsel %vm2275, 1.5707964, %v2305
          %v2309 = vsel %vm2276, 1.5707964, %v2306
          %v2310 = vmul.f32 %v2301, %v2301
          %v2311 = vmul.f32 %v2302, %v2302
          %v2312 = vmul.f32 %v2303, %v2303
          %v2313 = vmul.f32 %v2310, 0.080537446
          %v2314 = vmul.f32 %v2311, 0.080537446
          %v2315 = vmul.f32 %v2312, 0.080537446
          %v2316 = vsub.f32 %v2313, 0.13877685
          %v2317 = vsub.f32 %v2314, 0.13877685
          %v2318 = vsub.f32 %v2315, 0.13877685
          %v2319 = vmul.f32 %v2316, %v2310
          %v2320 = vmul.f32 %v2317, %v2311
          %v2321 = vmul.f32 %v2318, %v2312
          %v2322 = vadd.f32 %v2319, 0.19977711
          %v2323 = vadd.f32 %v2320, 0.19977711
          %v2324 = vadd.f32 %v2321, 0.19977711
          %v2325 = vmul.f32 %v2322, %v2310
          %v2326 = vmul.f32 %v2323, %v2311
          %v2327 = vmul.f32 %v2324, %v2312
          %v2328 = vsub.f32 %v2325, 0.3333295
          %v2329 = vsub.f32 %v2326, 0.3333295
          %v2330 = vsub.f32 %v2327, 0.3333295
          %v2331 = vmul.f32 %v2328, %v2310
          %v2332 = vmul.f32 %v2329, %v2311
          %v2333 = vmul.f32 %v2330, %v2312
          %v2334 = vmul.f32 %v2331, %v2301
          %v2335 = vmul.f32 %v2332, %v2302
          %v2336 = vmul.f32 %v2333, %v2303
          %v2337 = vadd.f32 %v2334, %v2301
          %v2338 = vadd.f32 %v2335, %v2302
          %v2339 = vadd.f32 %v2336, %v2303
          %v2340 = vadd.f32 %v2307, %v2337
          %v2341 = vadd.f32 %v2308, %v2338
          %v2342 = vadd.f32 %v2309, %v2339
          %v2343 = vmul.f32 %v2340, 2.0
          %v2344 = vmul.f32 %v2341, 2.0
          %v2345 = vmul.f32 %v2342, 2.0
          %v2346 = vmul.f32 %v2343, %v2343
          %v2347 = vmul.f32 %v2344, %v2344
          %v2348 = vmul.f32 %v2345, %v2345
          %v2349 = vsel %vm2153, %v2346, 0.0
          %v2350 = vsel %vm2153, %v2347, 0.0
          %v2351 = vadd.f32 %v2349, %v2350
          %v2352 = vsel %vm2160, %v2348, 0.0
          %v2353 = vadd.f32 %v2351, %v2352
          %2354 = vadd.xlane.f32.xlu0 %v2353
          %v2355 = vpop.xlane.xlu0 %2354
          %v2356 = vrot.slane %v2355, 4
          %v2357 = vadd.f32 %v2355, %v2356
          %v2358 = vrot.slane %v2357, 2
          %v2359 = vadd.f32 %v2357, %v2358
          %v2360 = vrot.slane %v2359, 1
          %v2361 = vadd.f32 %v2359, %v2360
          %s2362 = vtos %v2361
          %v2363 = vstv %s2362
          %v2364 = vmul.f32 %v2363, 0.19753087
          %2365 = vst [vmem:[%s467] sm:$0xff] %v2364
        $region68: #{tpu_custom_call.1} parent=39 // pred_fallthru
          _
        %s2366 = sand.u32 %s192, 1
        %s2367 = scalar_lea.sflag [#allocation5], %s2366
        %s2368 = sand.u32 %s192, 1
        %s2369 = smul.addr %s2368, 8
        %s2370 = scalar_lea.vmem [#allocation11], %s2369
        %s2371 = sand.u32 %s32, 1
        %s2372 = scalar_lea.sflag [#allocation13], %s2371
        %s2373 = sand.u32 %s220, 1
        %s2374 = smul.addr %s2373, 8
        %s2375 = scalar_lea.vmem [#allocation12], %s2374
        %s2376 = sand.u32 %s32, 1
        %s2377 = scalar_lea.sflag [#allocation13], %s2376
        %s2378 = sand.u32 %s248, 1
        %s2379 = smul.addr %s2378, 8
        %s2380 = scalar_lea.vmem [#allocation14], %s2379
        // Predicated region
        $region69: #{tpu_custom_call.1} parent=39 // pred_check
          %p2381 = pneg %p202
        $region70: #{tpu_custom_call.1} parent=39 // pred_check_branch
          %2383 = sbr.rel (%p2381) target = $region72
        $region71: #{tpu_custom_call.1} parent=39 // pred_region
          %2385 = vsyncadd %s2367, 0
          %s2386 = smul.addr %s37, 3
          %s2387 = sadd.s32 %s38, %s2386
          %s2388 = smul.addr %s2387, 8
          %s2389 = scalar_lea.hbm %s5, %s2388
          %s2391 = sshll.u32 %s2370, 4
          %s2392 = int_to_ptr.vmem [resolvable:$true] %s2391
          %s2393 = sshll.u32 %s2389, 4
          %s2394 = int_to_ptr.hbm [resolvable:$true] %s2393
          %2396 = dma.vmem_to_hbm [thread:$0]  %s2392, 128, %s2394, %s2367
        $region72: #{tpu_custom_call.1} parent=39 // pred_fallthru
          _
        // Predicated region
        $region73: #{tpu_custom_call.1} parent=39 // pred_check
          %p2397 = pneg %p230
        $region74: #{tpu_custom_call.1} parent=39 // pred_check_branch
          %2399 = sbr.rel (%p2397) target = $region76
        $region75: #{tpu_custom_call.1} parent=39 // pred_region
          %2401 = vsyncadd %s2372, 0
          %s2402 = smul.addr %s37, 3
          %s2403 = sadd.s32 %s38, %s2402
          %s2404 = smul.addr %s2403, 8
          %s2405 = scalar_lea.hbm %s6, %s2404
          %s2407 = sshll.u32 %s2375, 4
          %s2408 = int_to_ptr.vmem [resolvable:$true] %s2407
          %s2409 = sshll.u32 %s2405, 4
          %s2410 = int_to_ptr.hbm [resolvable:$true] %s2409
          %2412 = dma.vmem_to_hbm [thread:$0]  %s2408, 128, %s2410, %s2372
        $region76: #{tpu_custom_call.1} parent=39 // pred_fallthru
          _
        // Predicated region
        $region77: #{tpu_custom_call.1} parent=39 // pred_check
          %p2413 = pneg %p258
        $region78: #{tpu_custom_call.1} parent=39 // pred_check_branch
          %2415 = sbr.rel (%p2413) target = $region80
        $region79: #{tpu_custom_call.1} parent=39 // pred_region
          %2417 = vsyncadd %s2377, 0
          %s2418 = smul.addr %s37, 3
          %s2419 = sadd.s32 %s38, %s2418
          %s2420 = smul.addr %s2419, 8
          %s2421 = scalar_lea.hbm %s7, %s2420
          %s2423 = sshll.u32 %s2380, 4
          %s2424 = int_to_ptr.vmem [resolvable:$true] %s2423
          %s2425 = sshll.u32 %s2421, 4
          %s2426 = int_to_ptr.hbm [resolvable:$true] %s2425
          %2428 = dma.vmem_to_hbm [thread:$0]  %s2424, 128, %s2426, %s2377
        $region80: #{tpu_custom_call.1} parent=39 // pred_fallthru
          _
      $region40: #{tpu_custom_call.1} parent=5 // pred_fallthru
        _
      %p2429 = scmp.le.s32.totalorder 2, %s27
      // Predicated region
      $region81: #{tpu_custom_call.1} parent=5 // pred_check
        %p2430 = pneg %p2429
      $region82: #{tpu_custom_call.1} parent=5 // pred_check_branch
        %2432 = sbr.rel (%p2430) target = $region84
      $region83: #{tpu_custom_call.1} parent=5 // pred_region
        %s2433 = ssub.s32 %s27, 2
        // Predicated region
        $region85: #{tpu_custom_call.1} parent=83 // pred_check
          %p2434 = pneg %p208
        $region86: #{tpu_custom_call.1} parent=83 // pred_check_branch
          %2436 = sbr.rel (%p2434) target = $region88
        $region87: #{tpu_custom_call.1} parent=83 // pred_region
          %s2437 = sand.u32 %s193, 1
          %s2438 = scalar_lea.sflag [#allocation5], %s2437
          %s2439 = sand.u32 %s193, 1
          %s2440 = smul.addr %s2439, 8
          %s2441 = scalar_lea.vmem [#allocation11], %s2440
          %2443 = dma.done %s2438, 128
        $region88: #{tpu_custom_call.1} parent=83 // pred_fallthru
          _
        // Predicated region
        $region89: #{tpu_custom_call.1} parent=83 // pred_check
          %p2444 = pneg %p236
        $region90: #{tpu_custom_call.1} parent=83 // pred_check_branch
          %2446 = sbr.rel (%p2444) target = $region92
        $region91: #{tpu_custom_call.1} parent=83 // pred_region
          %s2447 = sand.u32 %s33, 1
          %s2448 = scalar_lea.sflag [#allocation13], %s2447
          %s2449 = sand.u32 %s221, 1
          %s2450 = smul.addr %s2449, 8
          %s2451 = scalar_lea.vmem [#allocation12], %s2450
          %2453 = dma.done %s2448, 128
        $region92: #{tpu_custom_call.1} parent=83 // pred_fallthru
          _
        // Predicated region
        $region93: #{tpu_custom_call.1} parent=83 // pred_check
          %p2454 = pneg %p264
        $region94: #{tpu_custom_call.1} parent=83 // pred_check_branch
          %2456 = sbr.rel (%p2454) target = $region96
        $region95: #{tpu_custom_call.1} parent=83 // pred_region
          %s2457 = sand.u32 %s33, 1
          %s2458 = scalar_lea.sflag [#allocation13], %s2457
          %s2459 = sand.u32 %s249, 1
          %s2460 = smul.addr %s2459, 8
          %s2461 = scalar_lea.vmem [#allocation14], %s2460
          %2463 = dma.done %s2458, 128
        $region96: #{tpu_custom_call.1} parent=83 // pred_fallthru
          _
      $region84: #{tpu_custom_call.1} parent=5 // pred_fallthru
        _
    $region6: #{tpu_custom_call.1} parent=1 // loop_footer
      %s31 = sadd.s32 1, %s27
    $region7: #{tpu_custom_call.1} parent=1 // loop_footer_branch
      %26 = sbr.rel target = $region3
    $region8: #{tpu_custom_call.1} parent=1 // loop_exit
      _
    %2464 = vsyncpa [#allocation4], 1
    %s2465 = scalar_lea.sflag [#allocation4], 1
    %2466 = vsyncpa %s2465, 1
    %2467 = vsyncpa [#allocation7], 1
    %s2468 = scalar_lea.sflag [#allocation7], 1
    %2469 = vsyncpa %s2468, 1
    %2470 = vsyncpa [#allocation10], 1
    %s2471 = scalar_lea.sflag [#allocation10], 1
    %2472 = vsyncpa %s2471, 1
    %2473 = vsyncpa [#allocation5], 1
    %s2474 = scalar_lea.sflag [#allocation5], 1
    %2475 = vsyncpa %s2474, 1
    %2476 = vsyncpa [#allocation13], 1
    %s2477 = scalar_lea.sflag [#allocation13], 1
    %2478 = vsyncpa %s2477, 1

</llo_original>
